<compile_context>
chip_gen: v5e
topology: v5e:2x2
jax: 0.10.0
libtpu: 0.0.40
codegen_flags: <defaults>
</compile_context>

<pallas_src>
import jax
import jax.numpy as jnp
from jax import lax
from jax.experimental import pallas as pl
from jax.experimental.pallas import tpu as pltpu

BN_EPS = 1e-5
K_IN = 784                  # 28 * 28
HIDDEN = 512
N_CLASSES = 10
N_COL = 16                  # narrow column padding for w2 / b2 / logits
VMEM_LIMIT_BYTES = 48 * 1024 * 1024   # explicit scoped-VMEM limit; safe on v7x (64 MiB physical)


def dnn_kernel(x_ref, w1_ref, gamma_ref, beta_ref, w2_ref, b2_ref, o_ref):
    # ---- Layer 1: Linear(784 -> 512), bf16 x bf16 -> f32 MXU. b1 intentionally omitted:
    # the batch-mean subtraction in train-mode BN cancels it exactly.
    h = jnp.dot(x_ref[...], w1_ref[...], preferred_element_type=jnp.float32)

    # ---- BatchNorm1d(512), training mode (biased batch variance), two-pass form, f32.
    mean = jnp.mean(h, axis=0, keepdims=True)                 # (1, 512)
    hc = h - mean
    var = jnp.mean(hc * hc, axis=0, keepdims=True)            # (1, 512), >= 0 by construction
    scale = gamma_ref[...] * lax.rsqrt(var + BN_EPS)          # (1, 512)
    h = jnp.maximum(hc * scale + beta_ref[...], 0.0)          # BN + ReLU: fma + max per vreg

    # ---- Layer 2: Linear(512 -> 10), bf16 x bf16 -> f32 MXU, narrow 16-col padding.
    o_ref[...] = (
        jnp.dot(h.astype(jnp.bfloat16), w2_ref[...], preferred_element_type=jnp.float32)
        + b2_ref[...]
    )


def dnn_forward(x, params):
    """x: (B, 1, 28, 28) or (B, 784). Returns (B, 10) float32 logits."""
    w1, b1, gamma, beta, w2, b2 = params        # b1 unused by the kernel (cancels in BN)
    B = x.shape[0]
    # bf16 cast fused into the flatten; no K padding (Mosaic handles K = 784 internally).
    x2d = x.reshape(B, -1).astype(jnp.bfloat16)
    assert x2d.shape[1] == K_IN

    out_bytes = B * N_COL * 4
    io_bytes = (x2d.size * 2 + w1.size * 2 + gamma.size * 4 + beta.size * 4
                + w2.size * 2 + b2.size * 4 + out_bytes)
    # 2x safety factor covers sublane/lane layout padding and the f32 h / bf16-cast temporaries.
    assert 2 * io_bytes < VMEM_LIMIT_BYTES, "batch too large for single-block kernel"
    # TODO(synk): for large B, switch to a B-tiled grid with two-phase BN (accumulate per-feature
    # sum/sumsq across an 'arbitrary' pass, then normalize + ReLU + matmul2 per 256-row tile),
    # weights pinned via constant index_maps and the batch axis marked "parallel" so both v7x
    # TensorCores are used. Eval-mode BN (running stats) and running-stat updates are not covered.

    flops = 2 * B * K_IN * HIDDEN + 2 * B * HIDDEN * N_COL + 8 * B * HIDDEN

    vmem = pl.BlockSpec(memory_space=pltpu.MemorySpace.VMEM)
    out = pl.pallas_call(
        dnn_kernel,
        out_shape=jax.ShapeDtypeStruct((B, N_COL), jnp.float32),
        in_specs=[vmem] * 6,
        out_specs=vmem,
        compiler_params=pltpu.CompilerParams(vmem_limit_bytes=VMEM_LIMIT_BYTES),
        cost_estimate=pl.CostEstimate(
            flops=flops, transcendentals=HIDDEN, bytes_accessed=io_bytes),
    )(x2d, w1, gamma, beta, w2, b2)
    return out[:, :N_CLASSES]


def init_params(key):
    """PyTorch-style init; weights stored in the kernel's preferred layout:
    (in, out) orientation, w1 bf16, w2 bf16 padded to 16 columns, b2 padded to 16 columns."""
    k1, k2, k3, k4, k5, k6 = jax.random.split(key, 6)
    lim1 = 1.0 / jnp.sqrt(float(K_IN))
    lim2 = 1.0 / jnp.sqrt(float(HIDDEN))
    w1 = jax.random.uniform(k1, (K_IN, HIDDEN), jnp.float32, -lim1, lim1)
    b1 = jax.random.uniform(k2, (1, HIDDEN), jnp.float32, -lim1, lim1)
    gamma = 1.0 + 0.1 * jax.random.normal(k3, (1, HIDDEN), jnp.float32)
    beta = 0.1 * jax.random.normal(k4, (1, HIDDEN), jnp.float32)
    w2 = jax.random.uniform(k5, (HIDDEN, N_CLASSES), jnp.float32, -lim2, lim2)
    b2 = jax.random.uniform(k6, (1, N_CLASSES), jnp.float32, -lim2, lim2)

    w1_k = w1.astype(jnp.bfloat16)                                               # (784, 512) bf16
    w2_k = jnp.pad(w2, ((0, 0), (0, N_COL - N_CLASSES))).astype(jnp.bfloat16)    # (512, 16)  bf16
    b2_k = jnp.pad(b2, ((0, 0), (0, N_COL - N_CLASSES)))                         # (1, 16)    f32
    return w1_k, b1, gamma, beta, w2_k, b2_k


def dnn_ref(x, params):
    """Pure-JAX f32 reference with PyTorch semantics (includes b1, unfused BN),
    using the same stored (bf16-quantized) weights in f32 math."""
    w1, b1, gamma, beta, w2, b2 = params
    B = x.shape[0]
    x2d = x.reshape(B, -1).astype(jnp.float32)
    h = x2d @ w1.astype(jnp.float32) + b1
    mean = jnp.mean(h, axis=0, keepdims=True)
    var = jnp.mean((h - mean) ** 2, axis=0, keepdims=True)
    h = (h - mean) * lax.rsqrt(var + BN_EPS)
    h = h * gamma + beta
    h = jnp.maximum(h, 0.0)
    return h @ w2[:, :N_CLASSES].astype(jnp.float32) + b2[:, :N_CLASSES]


if __name__ == "__main__":
    key = jax.random.PRNGKey(0)
    kx, kp = jax.random.split(key)

    # Fashion-MNIST-shaped input, flattened to 784 inside forward.
    B = 8
    x = jax.random.normal(kx, (B, 1, 28, 28), jnp.float32)
    params = init_params(kp)

    out = jax.block_until_ready(dnn_forward(x, params))
    ref = dnn_ref(x, params)

    assert out.shape == (B, N_CLASSES), out.shape
    # bf16 activations in both matmuls => bf16-level tolerance vs the pure-f32 reference
    # (which also includes the b1 that the kernel provably drops via BN mean cancellation).
    max_err = float(jnp.max(jnp.abs(out - ref)))
    assert jnp.allclose(out, ref, atol=3e-2, rtol=3e-2), f"mismatch vs reference, max_err={max_err}"

    print("KERNEL_OK")
</pallas_src>

<mosaic_0001>
module attributes {stable_mosaic.version = 11 : i64} {
  func.func @dnn_kernel(%arg0: memref<8x784xbf16, #tpu.memory_space<vmem>>, %arg1: memref<784x512xbf16, #tpu.memory_space<vmem>>, %arg2: memref<1x512xf32, #tpu.memory_space<vmem>>, %arg3: memref<1x512xf32, #tpu.memory_space<vmem>>, %arg4: memref<512x16xbf16, #tpu.memory_space<vmem>>, %arg5: memref<1x16xf32, #tpu.memory_space<vmem>>, %arg6: memref<8x16xf32, #tpu.memory_space<vmem>>) attributes {dimension_semantics = [], scalar_prefetch = 0 : i64, scratch_operands = 0 : i64, tpu.core_type = #tpu.core_type<tc>} {
    %c0 = arith.constant 0 : index
    %c0_0 = arith.constant 0 : index
    %0 = vector.load %arg0[%c0, %c0_0] : memref<8x784xbf16, #tpu.memory_space<vmem>>, vector<8x784xbf16>
    %c0_1 = arith.constant 0 : index
    %c0_2 = arith.constant 0 : index
    %1 = vector.load %arg1[%c0_1, %c0_2] : memref<784x512xbf16, #tpu.memory_space<vmem>>, vector<784x512xbf16>
    %cst = arith.constant dense<0.000000e+00> : vector<8x512xf32>
    %2 = tpu.matmul %0, %1, %cst {dimension_numbers = #tpu.dot_dimension_numbers<[1], [0], [0], [1], [0, 0, 1, 1], [], []>} : vector<8x784xbf16>, vector<784x512xbf16>, vector<8x512xf32> -> vector<8x512xf32>
    %cst_3 = arith.constant dense<0.000000e+00> : vector<512xf32>
    %3 = vector.multi_reduction <add>, %2, %cst_3 [0] : vector<8x512xf32> to vector<512xf32>
    %4 = vector.shape_cast %3 : vector<512xf32> to vector<1x512xf32>
    %cst_4 = arith.constant 8.000000e+00 : f32
    %5 = vector.broadcast %cst_4 : f32 to vector<1x512xf32>
    %6 = arith.divf %4, %5 : vector<1x512xf32>
    %7 = vector.broadcast %6 : vector<1x512xf32> to vector<8x512xf32>
    %8 = arith.subf %2, %7 : vector<8x512xf32>
    %9 = arith.mulf %8, %8 : vector<8x512xf32>
    %cst_5 = arith.constant dense<0.000000e+00> : vector<512xf32>
    %10 = vector.multi_reduction <add>, %9, %cst_5 [0] : vector<8x512xf32> to vector<512xf32>
    %11 = vector.shape_cast %10 : vector<512xf32> to vector<1x512xf32>
    %cst_6 = arith.constant 8.000000e+00 : f32
    %12 = vector.broadcast %cst_6 : f32 to vector<1x512xf32>
    %13 = arith.divf %11, %12 : vector<1x512xf32>
    %c0_7 = arith.constant 0 : index
    %c0_8 = arith.constant 0 : index
    %14 = vector.load %arg2[%c0_7, %c0_8] : memref<1x512xf32, #tpu.memory_space<vmem>>, vector<1x512xf32>
    %cst_9 = arith.constant 9.99999974E-6 : f32
    %15 = vector.broadcast %cst_9 : f32 to vector<1x512xf32>
    %16 = arith.addf %13, %15 : vector<1x512xf32>
    %17 = math.rsqrt %16 : vector<1x512xf32>
    %18 = arith.mulf %14, %17 : vector<1x512xf32>
    %19 = vector.broadcast %18 : vector<1x512xf32> to vector<8x512xf32>
    %20 = arith.mulf %8, %19 : vector<8x512xf32>
    %c0_10 = arith.constant 0 : index
    %c0_11 = arith.constant 0 : index
    %21 = vector.load %arg3[%c0_10, %c0_11] : memref<1x512xf32, #tpu.memory_space<vmem>>, vector<1x512xf32>
    %22 = vector.broadcast %21 : vector<1x512xf32> to vector<8x512xf32>
    %23 = arith.addf %20, %22 : vector<8x512xf32>
    %cst_12 = arith.constant 0.000000e+00 : f32
    %24 = vector.broadcast %cst_12 : f32 to vector<8x512xf32>
    %25 = arith.maximumf %23, %24 : vector<8x512xf32>
    %26 = arith.truncf %25 : vector<8x512xf32> to vector<8x512xbf16>
    %c0_13 = arith.constant 0 : index
    %c0_14 = arith.constant 0 : index
    %27 = vector.load %arg4[%c0_13, %c0_14] : memref<512x16xbf16, #tpu.memory_space<vmem>>, vector<512x16xbf16>
    %cst_15 = arith.constant dense<0.000000e+00> : vector<8x16xf32>
    %28 = tpu.matmul %26, %27, %cst_15 {dimension_numbers = #tpu.dot_dimension_numbers<[1], [0], [0], [1], [0, 0, 1, 1], [], []>} : vector<8x512xbf16>, vector<512x16xbf16>, vector<8x16xf32> -> vector<8x16xf32>
    %c0_16 = arith.constant 0 : index
    %c0_17 = arith.constant 0 : index
    %29 = vector.load %arg5[%c0_16, %c0_17] : memref<1x16xf32, #tpu.memory_space<vmem>>, vector<1x16xf32>
    %30 = vector.broadcast %29 : vector<1x16xf32> to vector<8x16xf32>
    %31 = arith.addf %28, %30 : vector<8x16xf32>
    %c0_18 = arith.constant 0 : index
    %c0_19 = arith.constant 0 : index
    %32 = vector.load %arg6[%c0_18, %c0_19] : memref<8x16xf32, #tpu.memory_space<vmem>>, vector<8x16xf32>
    tpu.vector_store %arg6[%c0_18, %c0_19], %31 {strides = array<i32>} : memref<8x16xf32, #tpu.memory_space<vmem>>, vector<8x16xf32>,
    return
  }
}

</mosaic_0001>

<llo_original>
// kernel: tpu_custom_call.1
$region0: #{tpu_custom_call.1}
  #allocation0 [shape = 'u32[]', space=smem, size = 0x4, offset = 0x4, fixed_abs, tag = 'smem constant byte address 0x4 - core index']
  #allocation1 [shape = 'u32[72,128]{1,0:T(1,128)}', space=vmem, size = 0x9000, scoped, tag = 'internal scratch']
  %s0 = inlined_call_operand.vmem [shape: bf16[8,784], index: 0, kind: input, shape index: {}]
  %s1 = inlined_call_operand.hbm [shape: bf16[784,512], index: 1, kind: input, shape index: {}]
  %s2 = inlined_call_operand.vmem [shape: f32[1,512], index: 2, kind: input, shape index: {}]
  %s3 = inlined_call_operand.vmem [shape: f32[1,512], index: 3, kind: input, shape index: {}]
  %s4 = inlined_call_operand.vmem [shape: bf16[512,16], index: 4, kind: input, shape index: {}]
  %s5 = inlined_call_operand.vmem [shape: f32[1,16], index: 5, kind: input, shape index: {}]
  %s6 = inlined_call_operand.hbm [shape: f32[8,16], index: 6, kind: output, shape index: {}]
  %s7 = sld [smem:[#allocation0]]
  $region38: #{tpu_custom_call.1} parent=0
    _
  %s9 = ssub.s32 1, %s7
  %s10 = scalar_select 0, %s9, %s7
  $region1: #{tpu_custom_call.1} parent=0
    #allocation2 [shape = 'u8[802816]{0}', space=vmem, size = 0xc4000, scoped, tag = 'input window, operand 1, single buffered']
    #allocation3 [shape = 's32[1]{0}', space=sflag, size = 0x4, scoped, tag = 'scoped memory for tpu_custom_call.1']
    #allocation4 [shape = 's32[1]{0}', space=sflag, size = 0x4, scoped, tag = 'scoped memory for tpu_custom_call.1']
    #allocation5 [shape = 'u8[4096]{0}', space=vmem, size = 0x1000, scoped, tag = 'output window, operand 0, single buffered']
    %11 = vsyncpa [#allocation3], 0
    %12 = vsyncpa [#allocation4], 0
    // Predicated region
    $region2: #{tpu_custom_call.1} parent=1 // pred_check
      _
    $region3: #{tpu_custom_call.1} parent=1 // pred_check_branch
      %14 = sbr.rel (0) target = $region5
    $region4: #{tpu_custom_call.1} parent=1 // pred_region
      _
    $region5: #{tpu_custom_call.1} parent=1 // pred_fallthru
      _
    // Predicated region
    $region6: #{tpu_custom_call.1} parent=1 // pred_check
      _
    $region7: #{tpu_custom_call.1} parent=1 // pred_check_branch
      %16 = sbr.rel (0) target = $region9
    $region8: #{tpu_custom_call.1} parent=1 // pred_region
      %18 = vsyncadd [#allocation3], 0
      %s19 = sshll.u32 %s1, 4
      %s20 = int_to_ptr.hbm [resolvable:$true] %s19
      %s21 = sshll.u32 [#allocation2], 4
      %s22 = int_to_ptr.vmem [resolvable:$true] %s21
      %27 = dma.hbm_to_vmem [thread:$0]  %s20, 25088, %s22, [#allocation3], 256, 256, 16
    $region9: #{tpu_custom_call.1} parent=1 // pred_fallthru
      _
    // Predicated region
    $region10: #{tpu_custom_call.1} parent=1 // pred_check
      _
    $region11: #{tpu_custom_call.1} parent=1 // pred_check_branch
      %29 = sbr.rel (0) target = $region13
    $region12: #{tpu_custom_call.1} parent=1 // pred_region
      _
    $region13: #{tpu_custom_call.1} parent=1 // pred_fallthru
      _
    // Predicated region
    $region14: #{tpu_custom_call.1} parent=1 // pred_check
      _
    $region15: #{tpu_custom_call.1} parent=1 // pred_check_branch
      %31 = sbr.rel (0) target = $region17
    $region16: #{tpu_custom_call.1} parent=1 // pred_region
      _
    $region17: #{tpu_custom_call.1} parent=1 // pred_fallthru
      _
    // Predicated region
    $region18: #{tpu_custom_call.1} parent=1 // pred_check
      _
    $region19: #{tpu_custom_call.1} parent=1 // pred_check_branch
      %33 = sbr.rel (0) target = $region21
    $region20: #{tpu_custom_call.1} parent=1 // pred_region
      _
    $region21: #{tpu_custom_call.1} parent=1 // pred_fallthru
      _
    // Predicated region
    $region22: #{tpu_custom_call.1} parent=1 // pred_check
      _
    $region23: #{tpu_custom_call.1} parent=1 // pred_check_branch
      %35 = sbr.rel (0) target = $region25
    $region24: #{tpu_custom_call.1} parent=1 // pred_region
      _
    $region25: #{tpu_custom_call.1} parent=1 // pred_fallthru
      _
    // Predicated region
    $region26: #{tpu_custom_call.1} parent=1 // pred_check
      _
    $region27: #{tpu_custom_call.1} parent=1 // pred_check_branch
      %37 = sbr.rel (0) target = $region29
    $region28: #{tpu_custom_call.1} parent=1 // pred_region
      %39 = dma.done [#allocation3], 25088
    $region29: #{tpu_custom_call.1} parent=1 // pred_fallthru
      _
    %v41 = vld [vmem:[%s0] sm:$0xff]
    %v42 = vld [vmem:[%s0 + $0x8] sm:$0xff]
    %v43 = vld [vmem:[%s0 + $0x10] sm:$0xff]
    %v44 = vld [vmem:[%s0 + $0x18] sm:$0xf]
    %v45 = vld [vmem:[#allocation2] sm:$0xff]
    %v46 = vld [vmem:[#allocation2 + $0x8] sm:$0xff]
    %v47 = vld [vmem:[#allocation2 + $0x10] sm:$0xff]
    %v48 = vld [vmem:[#allocation2 + $0x18] sm:$0xff]
    %v49 = vld [vmem:[#allocation2 + $0x20] sm:$0xff]
    %v50 = vld [vmem:[#allocation2 + $0x28] sm:$0xff]
    %v51 = vld [vmem:[#allocation2 + $0x30] sm:$0xff]
    %v52 = vld [vmem:[#allocation2 + $0x38] sm:$0xff]
    %v53 = vld [vmem:[#allocation2 + $0x40] sm:$0xff]
    %v54 = vld [vmem:[#allocation2 + $0x48] sm:$0xff]
    %v55 = vld [vmem:[#allocation2 + $0x50] sm:$0xff]
    %v56 = vld [vmem:[#allocation2 + $0x58] sm:$0xff]
    %v57 = vld [vmem:[#allocation2 + $0x60] sm:$0xff]
    %v58 = vld [vmem:[#allocation2 + $0x68] sm:$0xff]
    %v59 = vld [vmem:[#allocation2 + $0x70] sm:$0xff]
    %v60 = vld [vmem:[#allocation2 + $0x78] sm:$0xff]
    %v61 = vld [vmem:[#allocation2 + $0x80] sm:$0xff]
    %v62 = vld [vmem:[#allocation2 + $0x88] sm:$0xff]
    %v63 = vld [vmem:[#allocation2 + $0x90] sm:$0xff]
    %v64 = vld [vmem:[#allocation2 + $0x98] sm:$0xff]
    %v65 = vld [vmem:[#allocation2 + $0xa0] sm:$0xff]
    %v66 = vld [vmem:[#allocation2 + $0xa8] sm:$0xff]
    %v67 = vld [vmem:[#allocation2 + $0xb0] sm:$0xff]
    %v68 = vld [vmem:[#allocation2 + $0xb8] sm:$0xff]
    %v69 = vld [vmem:[#allocation2 + $0xc0] sm:$0xff]
    %v70 = vld [vmem:[#allocation2 + $0xc8] sm:$0xff]
    %v71 = vld [vmem:[#allocation2 + $0xd0] sm:$0xff]
    %v72 = vld [vmem:[#allocation2 + $0xd8] sm:$0xff]
    %v73 = vld [vmem:[#allocation2 + $0xe0] sm:$0xff]
    %v74 = vld [vmem:[#allocation2 + $0xe8] sm:$0xff]
    %v75 = vld [vmem:[#allocation2 + $0xf0] sm:$0xff]
    %v76 = vld [vmem:[#allocation2 + $0xf8] sm:$0xff]
    %v77 = vld [vmem:[#allocation2 + $0x100] sm:$0xff]
    %v78 = vld [vmem:[#allocation2 + $0x108] sm:$0xff]
    %v79 = vld [vmem:[#allocation2 + $0x110] sm:$0xff]
    %v80 = vld [vmem:[#allocation2 + $0x118] sm:$0xff]
    %v81 = vld [vmem:[#allocation2 + $0x120] sm:$0xff]
    %v82 = vld [vmem:[#allocation2 + $0x128] sm:$0xff]
    %v83 = vld [vmem:[#allocation2 + $0x130] sm:$0xff]
    %v84 = vld [vmem:[#allocation2 + $0x138] sm:$0xff]
    %v85 = vld [vmem:[#allocation2 + $0x140] sm:$0xff]
    %v86 = vld [vmem:[#allocation2 + $0x148] sm:$0xff]
    %v87 = vld [vmem:[#allocation2 + $0x150] sm:$0xff]
    %v88 = vld [vmem:[#allocation2 + $0x158] sm:$0xff]
    %v89 = vld [vmem:[#allocation2 + $0x160] sm:$0xff]
    %v90 = vld [vmem:[#allocation2 + $0x168] sm:$0xff]
    %v91 = vld [vmem:[#allocation2 + $0x170] sm:$0xff]
    %v92 = vld [vmem:[#allocation2 + $0x178] sm:$0xff]
    %v93 = vld [vmem:[#allocation2 + $0x180] sm:$0xff]
    %v94 = vld [vmem:[#allocation2 + $0x188] sm:$0xff]
    %v95 = vld [vmem:[#allocation2 + $0x190] sm:$0xff]
    %v96 = vld [vmem:[#allocation2 + $0x198] sm:$0xff]
    %v97 = vld [vmem:[#allocation2 + $0x1a0] sm:$0xff]
    %v98 = vld [vmem:[#allocation2 + $0x1a8] sm:$0xff]
    %v99 = vld [vmem:[#allocation2 + $0x1b0] sm:$0xff]
    %v100 = vld [vmem:[#allocation2 + $0x1b8] sm:$0xff]
    %v101 = vld [vmem:[#allocation2 + $0x1c0] sm:$0xff]
    %v102 = vld [vmem:[#allocation2 + $0x1c8] sm:$0xff]
    %v103 = vld [vmem:[#allocation2 + $0x1d0] sm:$0xff]
    %v104 = vld [vmem:[#allocation2 + $0x1d8] sm:$0xff]
    %v105 = vld [vmem:[#allocation2 + $0x1e0] sm:$0xff]
    %v106 = vld [vmem:[#allocation2 + $0x1e8] sm:$0xff]
    %v107 = vld [vmem:[#allocation2 + $0x1f0] sm:$0xff]
    %v108 = vld [vmem:[#allocation2 + $0x1f8] sm:$0xff]
    %v109 = vld [vmem:[#allocation2 + $0x200] sm:$0xff]
    %v110 = vld [vmem:[#allocation2 + $0x208] sm:$0xff]
    %v111 = vld [vmem:[#allocation2 + $0x210] sm:$0xff]
    %v112 = vld [vmem:[#allocation2 + $0x218] sm:$0xff]
    %v113 = vld [vmem:[#allocation2 + $0x220] sm:$0xff]
    %v114 = vld [vmem:[#allocation2 + $0x228] sm:$0xff]
    %v115 = vld [vmem:[#allocation2 + $0x230] sm:$0xff]
    %v116 = vld [vmem:[#allocation2 + $0x238] sm:$0xff]
    %v117 = vld [vmem:[#allocation2 + $0x240] sm:$0xff]
    %v118 = vld [vmem:[#allocation2 + $0x248] sm:$0xff]
    %v119 = vld [vmem:[#allocation2 + $0x250] sm:$0xff]
    %v120 = vld [vmem:[#allocation2 + $0x258] sm:$0xff]
    %v121 = vld [vmem:[#allocation2 + $0x260] sm:$0xff]
    %v122 = vld [vmem:[#allocation2 + $0x268] sm:$0xff]
    %v123 = vld [vmem:[#allocation2 + $0x270] sm:$0xff]
    %v124 = vld [vmem:[#allocation2 + $0x278] sm:$0xff]
    %v125 = vld [vmem:[#allocation2 + $0x280] sm:$0xff]
    %v126 = vld [vmem:[#allocation2 + $0x288] sm:$0xff]
    %v127 = vld [vmem:[#allocation2 + $0x290] sm:$0xff]
    %v128 = vld [vmem:[#allocation2 + $0x298] sm:$0xff]
    %v129 = vld [vmem:[#allocation2 + $0x2a0] sm:$0xff]
    %v130 = vld [vmem:[#allocation2 + $0x2a8] sm:$0xff]
    %v131 = vld [vmem:[#allocation2 + $0x2b0] sm:$0xff]
    %v132 = vld [vmem:[#allocation2 + $0x2b8] sm:$0xff]
    %v133 = vld [vmem:[#allocation2 + $0x2c0] sm:$0xff]
    %v134 = vld [vmem:[#allocation2 + $0x2c8] sm:$0xff]
    %v135 = vld [vmem:[#allocation2 + $0x2d0] sm:$0xff]
    %v136 = vld [vmem:[#allocation2 + $0x2d8] sm:$0xff]
    %v137 = vld [vmem:[#allocation2 + $0x2e0] sm:$0xff]
    %v138 = vld [vmem:[#allocation2 + $0x2e8] sm:$0xff]
    %v139 = vld [vmem:[#allocation2 + $0x2f0] sm:$0xff]
    %v140 = vld [vmem:[#allocation2 + $0x2f8] sm:$0xff]
    %v141 = vld [vmem:[#allocation2 + $0x300] sm:$0xff]
    %v142 = vld [vmem:[#allocation2 + $0x308] sm:$0xff]
    %v143 = vld [vmem:[#allocation2 + $0x310] sm:$0xff]
    %v144 = vld [vmem:[#allocation2 + $0x318] sm:$0xff]
    %v145 = vld [vmem:[#allocation2 + $0x320] sm:$0xff]
    %v146 = vld [vmem:[#allocation2 + $0x328] sm:$0xff]
    %v147 = vld [vmem:[#allocation2 + $0x330] sm:$0xff]
    %v148 = vld [vmem:[#allocation2 + $0x338] sm:$0xff]
    %v149 = vld [vmem:[#allocation2 + $0x340] sm:$0xff]
    %v150 = vld [vmem:[#allocation2 + $0x348] sm:$0xff]
    %v151 = vld [vmem:[#allocation2 + $0x350] sm:$0xff]
    %v152 = vld [vmem:[#allocation2 + $0x358] sm:$0xff]
    %v153 = vld [vmem:[#allocation2 + $0x360] sm:$0xff]
    %v154 = vld [vmem:[#allocation2 + $0x368] sm:$0xff]
    %v155 = vld [vmem:[#allocation2 + $0x370] sm:$0xff]
    %v156 = vld [vmem:[#allocation2 + $0x378] sm:$0xff]
    %v157 = vld [vmem:[#allocation2 + $0x380] sm:$0xff]
    %v158 = vld [vmem:[#allocation2 + $0x388] sm:$0xff]
    %v159 = vld [vmem:[#allocation2 + $0x390] sm:$0xff]
    %v160 = vld [vmem:[#allocation2 + $0x398] sm:$0xff]
    %v161 = vld [vmem:[#allocation2 + $0x3a0] sm:$0xff]
    %v162 = vld [vmem:[#allocation2 + $0x3a8] sm:$0xff]
    %v163 = vld [vmem:[#allocation2 + $0x3b0] sm:$0xff]
    %v164 = vld [vmem:[#allocation2 + $0x3b8] sm:$0xff]
    %v165 = vld [vmem:[#allocation2 + $0x3c0] sm:$0xff]
    %v166 = vld [vmem:[#allocation2 + $0x3c8] sm:$0xff]
    %v167 = vld [vmem:[#allocation2 + $0x3d0] sm:$0xff]
    %v168 = vld [vmem:[#allocation2 + $0x3d8] sm:$0xff]
    %v169 = vld [vmem:[#allocation2 + $0x3e0] sm:$0xff]
    %v170 = vld [vmem:[#allocation2 + $0x3e8] sm:$0xff]
    %v171 = vld [vmem:[#allocation2 + $0x3f0] sm:$0xff]
    %v172 = vld [vmem:[#allocation2 + $0x3f8] sm:$0xff]
    %v173 = vld [vmem:[#allocation2 + $0x400] sm:$0xff]
    %v174 = vld [vmem:[#allocation2 + $0x408] sm:$0xff]
    %v175 = vld [vmem:[#allocation2 + $0x410] sm:$0xff]
    %v176 = vld [vmem:[#allocation2 + $0x418] sm:$0xff]
    %v177 = vld [vmem:[#allocation2 + $0x420] sm:$0xff]
    %v178 = vld [vmem:[#allocation2 + $0x428] sm:$0xff]
    %v179 = vld [vmem:[#allocation2 + $0x430] sm:$0xff]
    %v180 = vld [vmem:[#allocation2 + $0x438] sm:$0xff]
    %v181 = vld [vmem:[#allocation2 + $0x440] sm:$0xff]
    %v182 = vld [vmem:[#allocation2 + $0x448] sm:$0xff]
    %v183 = vld [vmem:[#allocation2 + $0x450] sm:$0xff]
    %v184 = vld [vmem:[#allocation2 + $0x458] sm:$0xff]
    %v185 = vld [vmem:[#allocation2 + $0x460] sm:$0xff]
    %v186 = vld [vmem:[#allocation2 + $0x468] sm:$0xff]
    %v187 = vld [vmem:[#allocation2 + $0x470] sm:$0xff]
    %v188 = vld [vmem:[#allocation2 + $0x478] sm:$0xff]
    %v189 = vld [vmem:[#allocation2 + $0x480] sm:$0xff]
    %v190 = vld [vmem:[#allocation2 + $0x488] sm:$0xff]
    %v191 = vld [vmem:[#allocation2 + $0x490] sm:$0xff]
    %v192 = vld [vmem:[#allocation2 + $0x498] sm:$0xff]
    %v193 = vld [vmem:[#allocation2 + $0x4a0] sm:$0xff]
    %v194 = vld [vmem:[#allocation2 + $0x4a8] sm:$0xff]
    %v195 = vld [vmem:[#allocation2 + $0x4b0] sm:$0xff]
    %v196 = vld [vmem:[#allocation2 + $0x4b8] sm:$0xff]
    %v197 = vld [vmem:[#allocation2 + $0x4c0] sm:$0xff]
    %v198 = vld [vmem:[#allocation2 + $0x4c8] sm:$0xff]
    %v199 = vld [vmem:[#allocation2 + $0x4d0] sm:$0xff]
    %v200 = vld [vmem:[#allocation2 + $0x4d8] sm:$0xff]
    %v201 = vld [vmem:[#allocation2 + $0x4e0] sm:$0xff]
    %v202 = vld [vmem:[#allocation2 + $0x4e8] sm:$0xff]
    %v203 = vld [vmem:[#allocation2 + $0x4f0] sm:$0xff]
    %v204 = vld [vmem:[#allocation2 + $0x4f8] sm:$0xff]
    %v205 = vld [vmem:[#allocation2 + $0x500] sm:$0xff]
    %v206 = vld [vmem:[#allocation2 + $0x508] sm:$0xff]
    %v207 = vld [vmem:[#allocation2 + $0x510] sm:$0xff]
    %v208 = vld [vmem:[#allocation2 + $0x518] sm:$0xff]
    %v209 = vld [vmem:[#allocation2 + $0x520] sm:$0xff]
    %v210 = vld [vmem:[#allocation2 + $0x528] sm:$0xff]
    %v211 = vld [vmem:[#allocation2 + $0x530] sm:$0xff]
    %v212 = vld [vmem:[#allocation2 + $0x538] sm:$0xff]
    %v213 = vld [vmem:[#allocation2 + $0x540] sm:$0xff]
    %v214 = vld [vmem:[#allocation2 + $0x548] sm:$0xff]
    %v215 = vld [vmem:[#allocation2 + $0x550] sm:$0xff]
    %v216 = vld [vmem:[#allocation2 + $0x558] sm:$0xff]
    %v217 = vld [vmem:[#allocation2 + $0x560] sm:$0xff]
    %v218 = vld [vmem:[#allocation2 + $0x568] sm:$0xff]
    %v219 = vld [vmem:[#allocation2 + $0x570] sm:$0xff]
    %v220 = vld [vmem:[#allocation2 + $0x578] sm:$0xff]
    %v221 = vld [vmem:[#allocation2 + $0x580] sm:$0xff]
    %v222 = vld [vmem:[#allocation2 + $0x588] sm:$0xff]
    %v223 = vld [vmem:[#allocation2 + $0x590] sm:$0xff]
    %v224 = vld [vmem:[#allocation2 + $0x598] sm:$0xff]
    %v225 = vld [vmem:[#allocation2 + $0x5a0] sm:$0xff]
    %v226 = vld [vmem:[#allocation2 + $0x5a8] sm:$0xff]
    %v227 = vld [vmem:[#allocation2 + $0x5b0] sm:$0xff]
    %v228 = vld [vmem:[#allocation2 + $0x5b8] sm:$0xff]
    %v229 = vld [vmem:[#allocation2 + $0x5c0] sm:$0xff]
    %v230 = vld [vmem:[#allocation2 + $0x5c8] sm:$0xff]
    %v231 = vld [vmem:[#allocation2 + $0x5d0] sm:$0xff]
    %v232 = vld [vmem:[#allocation2 + $0x5d8] sm:$0xff]
    %v233 = vld [vmem:[#allocation2 + $0x5e0] sm:$0xff]
    %v234 = vld [vmem:[#allocation2 + $0x5e8] sm:$0xff]
    %v235 = vld [vmem:[#allocation2 + $0x5f0] sm:$0xff]
    %v236 = vld [vmem:[#allocation2 + $0x5f8] sm:$0xff]
    %v237 = vld [vmem:[#allocation2 + $0x600] sm:$0xff]
    %v238 = vld [vmem:[#allocation2 + $0x608] sm:$0xff]
    %v239 = vld [vmem:[#allocation2 + $0x610] sm:$0xff]
    %v240 = vld [vmem:[#allocation2 + $0x618] sm:$0xff]
    %v245 = vunpack.c.l.b16 %v41
    %v246 = vunpack.c.h.b16 %v41
    %v247 = vunpack.c.l.b16 %v42
    %v248 = vunpack.c.h.b16 %v42
    %v249 = vunpack.c.l.b16 %v43
    %v250 = vunpack.c.h.b16 %v43
    %v251 = vunpack.c.l.b16 %v44
    %v252 = vpack.c.b16 %v245, %v245
    %v253 = vpack.c.b16 %v246, %v246
    %v254 = vpack.c.b16 %v247, %v247
    %v255 = vpack.c.b16 %v248, %v248
    %v256 = vpack.c.b16 %v249, %v249
    %v257 = vpack.c.b16 %v250, %v250
    %v258 = vpack.c.b16 %v251, %v251
    %v461 = vunpack.c.l.b16 %v45
    %v462 = vunpack.c.h.b16 %v45
    %v463 = vunpack.c.l.b16 %v46
    %v464 = vunpack.c.h.b16 %v46
    %v465 = vunpack.c.l.b16 %v47
    %v466 = vunpack.c.h.b16 %v47
    %v467 = vunpack.c.l.b16 %v48
    %v468 = vunpack.c.h.b16 %v48
    %v469 = vunpack.c.l.b16 %v49
    %v470 = vunpack.c.h.b16 %v49
    %v471 = vunpack.c.l.b16 %v50
    %v472 = vunpack.c.h.b16 %v50
    %v473 = vunpack.c.l.b16 %v51
    %v474 = vunpack.c.h.b16 %v51
    %v475 = vunpack.c.l.b16 %v52
    %v476 = vunpack.c.h.b16 %v52
    %v477 = vunpack.c.l.b16 %v53
    %v478 = vunpack.c.h.b16 %v53
    %v479 = vunpack.c.l.b16 %v54
    %v480 = vunpack.c.h.b16 %v54
    %v481 = vunpack.c.l.b16 %v55
    %v482 = vunpack.c.h.b16 %v55
    %v483 = vunpack.c.l.b16 %v56
    %v484 = vunpack.c.h.b16 %v56
    %v485 = vunpack.c.l.b16 %v57
    %v486 = vunpack.c.h.b16 %v57
    %v487 = vunpack.c.l.b16 %v58
    %v488 = vunpack.c.h.b16 %v58
    %v489 = vunpack.c.l.b16 %v59
    %v490 = vunpack.c.h.b16 %v59
    %v491 = vunpack.c.l.b16 %v60
    %v492 = vunpack.c.h.b16 %v60
    %v493 = vunpack.c.l.b16 %v61
    %v494 = vunpack.c.h.b16 %v61
    %v495 = vunpack.c.l.b16 %v62
    %v496 = vunpack.c.h.b16 %v62
    %v497 = vunpack.c.l.b16 %v63
    %v498 = vunpack.c.h.b16 %v63
    %v499 = vunpack.c.l.b16 %v64
    %v500 = vunpack.c.h.b16 %v64
    %v501 = vunpack.c.l.b16 %v65
    %v502 = vunpack.c.h.b16 %v65
    %v503 = vunpack.c.l.b16 %v66
    %v504 = vunpack.c.h.b16 %v66
    %v505 = vunpack.c.l.b16 %v67
    %v506 = vunpack.c.h.b16 %v67
    %v507 = vunpack.c.l.b16 %v68
    %v508 = vunpack.c.h.b16 %v68
    %v509 = vunpack.c.l.b16 %v69
    %v510 = vunpack.c.h.b16 %v69
    %v511 = vunpack.c.l.b16 %v70
    %v512 = vunpack.c.h.b16 %v70
    %v513 = vunpack.c.l.b16 %v71
    %v514 = vunpack.c.h.b16 %v71
    %v515 = vunpack.c.l.b16 %v72
    %v516 = vunpack.c.h.b16 %v72
    %v517 = vunpack.c.l.b16 %v73
    %v518 = vunpack.c.h.b16 %v73
    %v519 = vunpack.c.l.b16 %v74
    %v520 = vunpack.c.h.b16 %v74
    %v521 = vunpack.c.l.b16 %v75
    %v522 = vunpack.c.h.b16 %v75
    %v523 = vunpack.c.l.b16 %v76
    %v524 = vunpack.c.h.b16 %v76
    %v525 = vunpack.c.l.b16 %v77
    %v526 = vunpack.c.h.b16 %v77
    %v527 = vunpack.c.l.b16 %v78
    %v528 = vunpack.c.h.b16 %v78
    %v529 = vunpack.c.l.b16 %v79
    %v530 = vunpack.c.h.b16 %v79
    %v531 = vunpack.c.l.b16 %v80
    %v532 = vunpack.c.h.b16 %v80
    %v533 = vunpack.c.l.b16 %v81
    %v534 = vunpack.c.h.b16 %v81
    %v535 = vunpack.c.l.b16 %v82
    %v536 = vunpack.c.h.b16 %v82
    %v537 = vunpack.c.l.b16 %v83
    %v538 = vunpack.c.h.b16 %v83
    %v539 = vunpack.c.l.b16 %v84
    %v540 = vunpack.c.h.b16 %v84
    %v541 = vunpack.c.l.b16 %v85
    %v542 = vunpack.c.h.b16 %v85
    %v543 = vunpack.c.l.b16 %v86
    %v544 = vunpack.c.h.b16 %v86
    %v545 = vunpack.c.l.b16 %v87
    %v546 = vunpack.c.h.b16 %v87
    %v547 = vunpack.c.l.b16 %v88
    %v548 = vunpack.c.h.b16 %v88
    %v549 = vunpack.c.l.b16 %v89
    %v550 = vunpack.c.h.b16 %v89
    %v551 = vunpack.c.l.b16 %v90
    %v552 = vunpack.c.h.b16 %v90
    %v553 = vunpack.c.l.b16 %v91
    %v554 = vunpack.c.h.b16 %v91
    %v555 = vunpack.c.l.b16 %v92
    %v556 = vunpack.c.h.b16 %v92
    %v557 = vunpack.c.l.b16 %v93
    %v558 = vunpack.c.h.b16 %v93
    %v559 = vunpack.c.l.b16 %v94
    %v560 = vunpack.c.h.b16 %v94
    %v561 = vunpack.c.l.b16 %v95
    %v562 = vunpack.c.h.b16 %v95
    %v563 = vunpack.c.l.b16 %v96
    %v564 = vunpack.c.h.b16 %v96
    %v565 = vunpack.c.l.b16 %v97
    %v566 = vunpack.c.h.b16 %v97
    %v567 = vunpack.c.l.b16 %v98
    %v568 = vunpack.c.h.b16 %v98
    %v569 = vunpack.c.l.b16 %v99
    %v570 = vunpack.c.h.b16 %v99
    %v571 = vunpack.c.l.b16 %v100
    %v572 = vunpack.c.h.b16 %v100
    %v573 = vunpack.c.l.b16 %v101
    %v574 = vunpack.c.h.b16 %v101
    %v575 = vunpack.c.l.b16 %v102
    %v576 = vunpack.c.h.b16 %v102
    %v577 = vunpack.c.l.b16 %v103
    %v578 = vunpack.c.h.b16 %v103
    %v579 = vunpack.c.l.b16 %v104
    %v580 = vunpack.c.h.b16 %v104
    %v581 = vunpack.c.l.b16 %v105
    %v582 = vunpack.c.h.b16 %v105
    %v583 = vunpack.c.l.b16 %v106
    %v584 = vunpack.c.h.b16 %v106
    %v585 = vunpack.c.l.b16 %v107
    %v586 = vunpack.c.h.b16 %v107
    %v587 = vunpack.c.l.b16 %v108
    %v588 = vunpack.c.h.b16 %v108
    %v589 = vunpack.c.l.b16 %v109
    %v590 = vunpack.c.h.b16 %v109
    %v591 = vunpack.c.l.b16 %v110
    %v592 = vunpack.c.h.b16 %v110
    %v593 = vunpack.c.l.b16 %v111
    %v594 = vunpack.c.h.b16 %v111
    %v595 = vunpack.c.l.b16 %v112
    %v596 = vunpack.c.h.b16 %v112
    %v597 = vunpack.c.l.b16 %v113
    %v598 = vunpack.c.h.b16 %v113
    %v599 = vunpack.c.l.b16 %v114
    %v600 = vunpack.c.h.b16 %v114
    %v601 = vunpack.c.l.b16 %v115
    %v602 = vunpack.c.h.b16 %v115
    %v603 = vunpack.c.l.b16 %v116
    %v604 = vunpack.c.h.b16 %v116
    %v605 = vunpack.c.l.b16 %v117
    %v606 = vunpack.c.h.b16 %v117
    %v607 = vunpack.c.l.b16 %v118
    %v608 = vunpack.c.h.b16 %v118
    %v609 = vunpack.c.l.b16 %v119
    %v610 = vunpack.c.h.b16 %v119
    %v611 = vunpack.c.l.b16 %v120
    %v612 = vunpack.c.h.b16 %v120
    %v613 = vunpack.c.l.b16 %v121
    %v614 = vunpack.c.h.b16 %v121
    %v615 = vunpack.c.l.b16 %v122
    %v616 = vunpack.c.h.b16 %v122
    %v617 = vunpack.c.l.b16 %v123
    %v618 = vunpack.c.h.b16 %v123
    %v619 = vunpack.c.l.b16 %v124
    %v620 = vunpack.c.h.b16 %v124
    %v621 = vunpack.c.l.b16 %v125
    %v622 = vunpack.c.h.b16 %v125
    %v623 = vunpack.c.l.b16 %v126
    %v624 = vunpack.c.h.b16 %v126
    %v625 = vunpack.c.l.b16 %v127
    %v626 = vunpack.c.h.b16 %v127
    %v627 = vunpack.c.l.b16 %v128
    %v628 = vunpack.c.h.b16 %v128
    %v629 = vunpack.c.l.b16 %v129
    %v630 = vunpack.c.h.b16 %v129
    %v631 = vunpack.c.l.b16 %v130
    %v632 = vunpack.c.h.b16 %v130
    %v633 = vunpack.c.l.b16 %v131
    %v634 = vunpack.c.h.b16 %v131
    %v635 = vunpack.c.l.b16 %v132
    %v636 = vunpack.c.h.b16 %v132
    %v637 = vunpack.c.l.b16 %v133
    %v638 = vunpack.c.h.b16 %v133
    %v639 = vunpack.c.l.b16 %v134
    %v640 = vunpack.c.h.b16 %v134
    %v641 = vunpack.c.l.b16 %v135
    %v642 = vunpack.c.h.b16 %v135
    %v643 = vunpack.c.l.b16 %v136
    %v644 = vunpack.c.h.b16 %v136
    %v645 = vunpack.c.l.b16 %v137
    %v646 = vunpack.c.h.b16 %v137
    %v647 = vunpack.c.l.b16 %v138
    %v648 = vunpack.c.h.b16 %v138
    %v649 = vunpack.c.l.b16 %v139
    %v650 = vunpack.c.h.b16 %v139
    %v651 = vunpack.c.l.b16 %v140
    %v652 = vunpack.c.h.b16 %v140
    %v653 = vunpack.c.l.b16 %v141
    %v654 = vunpack.c.h.b16 %v141
    %v655 = vunpack.c.l.b16 %v142
    %v656 = vunpack.c.h.b16 %v142
    %v657 = vunpack.c.l.b16 %v143
    %v658 = vunpack.c.h.b16 %v143
    %v659 = vunpack.c.l.b16 %v144
    %v660 = vunpack.c.h.b16 %v144
    %v661 = vunpack.c.l.b16 %v145
    %v662 = vunpack.c.h.b16 %v145
    %v663 = vunpack.c.l.b16 %v146
    %v664 = vunpack.c.h.b16 %v146
    %v665 = vunpack.c.l.b16 %v147
    %v666 = vunpack.c.h.b16 %v147
    %v667 = vunpack.c.l.b16 %v148
    %v668 = vunpack.c.h.b16 %v148
    %v669 = vunpack.c.l.b16 %v149
    %v670 = vunpack.c.h.b16 %v149
    %v671 = vunpack.c.l.b16 %v150
    %v672 = vunpack.c.h.b16 %v150
    %v673 = vunpack.c.l.b16 %v151
    %v674 = vunpack.c.h.b16 %v151
    %v675 = vunpack.c.l.b16 %v152
    %v676 = vunpack.c.h.b16 %v152
    %v677 = vunpack.c.l.b16 %v153
    %v678 = vunpack.c.h.b16 %v153
    %v679 = vunpack.c.l.b16 %v154
    %v680 = vunpack.c.h.b16 %v154
    %v681 = vunpack.c.l.b16 %v155
    %v682 = vunpack.c.h.b16 %v155
    %v683 = vunpack.c.l.b16 %v156
    %v684 = vunpack.c.h.b16 %v156
    %v685 = vunpack.c.l.b16 %v157
    %v686 = vunpack.c.h.b16 %v157
    %v687 = vunpack.c.l.b16 %v158
    %v688 = vunpack.c.h.b16 %v158
    %v689 = vunpack.c.l.b16 %v159
    %v690 = vunpack.c.h.b16 %v159
    %v691 = vunpack.c.l.b16 %v160
    %v692 = vunpack.c.h.b16 %v160
    %v693 = vunpack.c.l.b16 %v161
    %v694 = vunpack.c.h.b16 %v161
    %v695 = vunpack.c.l.b16 %v162
    %v696 = vunpack.c.h.b16 %v162
    %v697 = vunpack.c.l.b16 %v163
    %v698 = vunpack.c.h.b16 %v163
    %v699 = vunpack.c.l.b16 %v164
    %v700 = vunpack.c.h.b16 %v164
    %v701 = vunpack.c.l.b16 %v165
    %v702 = vunpack.c.h.b16 %v165
    %v703 = vunpack.c.l.b16 %v166
    %v704 = vunpack.c.h.b16 %v166
    %v705 = vunpack.c.l.b16 %v167
    %v706 = vunpack.c.h.b16 %v167
    %v707 = vunpack.c.l.b16 %v168
    %v708 = vunpack.c.h.b16 %v168
    %v709 = vunpack.c.l.b16 %v169
    %v710 = vunpack.c.h.b16 %v169
    %v711 = vunpack.c.l.b16 %v170
    %v712 = vunpack.c.h.b16 %v170
    %v713 = vunpack.c.l.b16 %v171
    %v714 = vunpack.c.h.b16 %v171
    %v715 = vunpack.c.l.b16 %v172
    %v716 = vunpack.c.h.b16 %v172
    %v717 = vunpack.c.l.b16 %v173
    %v718 = vunpack.c.h.b16 %v173
    %v719 = vunpack.c.l.b16 %v174
    %v720 = vunpack.c.h.b16 %v174
    %v721 = vunpack.c.l.b16 %v175
    %v722 = vunpack.c.h.b16 %v175
    %v723 = vunpack.c.l.b16 %v176
    %v724 = vunpack.c.h.b16 %v176
    %v725 = vunpack.c.l.b16 %v177
    %v726 = vunpack.c.h.b16 %v177
    %v727 = vunpack.c.l.b16 %v178
    %v728 = vunpack.c.h.b16 %v178
    %v729 = vunpack.c.l.b16 %v179
    %v730 = vunpack.c.h.b16 %v179
    %v731 = vunpack.c.l.b16 %v180
    %v732 = vunpack.c.h.b16 %v180
    %v733 = vunpack.c.l.b16 %v181
    %v734 = vunpack.c.h.b16 %v181
    %v735 = vunpack.c.l.b16 %v182
    %v736 = vunpack.c.h.b16 %v182
    %v737 = vunpack.c.l.b16 %v183
    %v738 = vunpack.c.h.b16 %v183
    %v739 = vunpack.c.l.b16 %v184
    %v740 = vunpack.c.h.b16 %v184
    %v741 = vunpack.c.l.b16 %v185
    %v742 = vunpack.c.h.b16 %v185
    %v743 = vunpack.c.l.b16 %v186
    %v744 = vunpack.c.h.b16 %v186
    %v745 = vunpack.c.l.b16 %v187
    %v746 = vunpack.c.h.b16 %v187
    %v747 = vunpack.c.l.b16 %v188
    %v748 = vunpack.c.h.b16 %v188
    %v749 = vunpack.c.l.b16 %v189
    %v750 = vunpack.c.h.b16 %v189
    %v751 = vunpack.c.l.b16 %v190
    %v752 = vunpack.c.h.b16 %v190
    %v753 = vunpack.c.l.b16 %v191
    %v754 = vunpack.c.h.b16 %v191
    %v755 = vunpack.c.l.b16 %v192
    %v756 = vunpack.c.h.b16 %v192
    %v757 = vunpack.c.l.b16 %v193
    %v758 = vunpack.c.h.b16 %v193
    %v759 = vunpack.c.l.b16 %v194
    %v760 = vunpack.c.h.b16 %v194
    %v761 = vunpack.c.l.b16 %v195
    %v762 = vunpack.c.h.b16 %v195
    %v763 = vunpack.c.l.b16 %v196
    %v764 = vunpack.c.h.b16 %v196
    %v765 = vunpack.c.l.b16 %v197
    %v766 = vunpack.c.h.b16 %v197
    %v767 = vunpack.c.l.b16 %v198
    %v768 = vunpack.c.h.b16 %v198
    %v769 = vunpack.c.l.b16 %v199
    %v770 = vunpack.c.h.b16 %v199
    %v771 = vunpack.c.l.b16 %v200
    %v772 = vunpack.c.h.b16 %v200
    %v773 = vunpack.c.l.b16 %v201
    %v774 = vunpack.c.h.b16 %v201
    %v775 = vunpack.c.l.b16 %v202
    %v776 = vunpack.c.h.b16 %v202
    %v777 = vunpack.c.l.b16 %v203
    %v778 = vunpack.c.h.b16 %v203
    %v779 = vunpack.c.l.b16 %v204
    %v780 = vunpack.c.h.b16 %v204
    %v781 = vunpack.c.l.b16 %v205
    %v782 = vunpack.c.h.b16 %v205
    %v783 = vunpack.c.l.b16 %v206
    %v784 = vunpack.c.h.b16 %v206
    %v785 = vunpack.c.l.b16 %v207
    %v786 = vunpack.c.h.b16 %v207
    %v787 = vunpack.c.l.b16 %v208
    %v788 = vunpack.c.h.b16 %v208
    %v789 = vunpack.c.l.b16 %v209
    %v790 = vunpack.c.h.b16 %v209
    %v791 = vunpack.c.l.b16 %v210
    %v792 = vunpack.c.h.b16 %v210
    %v793 = vunpack.c.l.b16 %v211
    %v794 = vunpack.c.h.b16 %v211
    %v795 = vunpack.c.l.b16 %v212
    %v796 = vunpack.c.h.b16 %v212
    %v797 = vunpack.c.l.b16 %v213
    %v798 = vunpack.c.h.b16 %v213
    %v799 = vunpack.c.l.b16 %v214
    %v800 = vunpack.c.h.b16 %v214
    %v801 = vunpack.c.l.b16 %v215
    %v802 = vunpack.c.h.b16 %v215
    %v803 = vunpack.c.l.b16 %v216
    %v804 = vunpack.c.h.b16 %v216
    %v805 = vunpack.c.l.b16 %v217
    %v806 = vunpack.c.h.b16 %v217
    %v807 = vunpack.c.l.b16 %v218
    %v808 = vunpack.c.h.b16 %v218
    %v809 = vunpack.c.l.b16 %v219
    %v810 = vunpack.c.h.b16 %v219
    %v811 = vunpack.c.l.b16 %v220
    %v812 = vunpack.c.h.b16 %v220
    %v813 = vunpack.c.l.b16 %v221
    %v814 = vunpack.c.h.b16 %v221
    %v815 = vunpack.c.l.b16 %v222
    %v816 = vunpack.c.h.b16 %v222
    %v817 = vunpack.c.l.b16 %v223
    %v818 = vunpack.c.h.b16 %v223
    %v819 = vunpack.c.l.b16 %v224
    %v820 = vunpack.c.h.b16 %v224
    %v821 = vunpack.c.l.b16 %v225
    %v822 = vunpack.c.h.b16 %v225
    %v823 = vunpack.c.l.b16 %v226
    %v824 = vunpack.c.h.b16 %v226
    %v825 = vunpack.c.l.b16 %v227
    %v826 = vunpack.c.h.b16 %v227
    %v827 = vunpack.c.l.b16 %v228
    %v828 = vunpack.c.h.b16 %v228
    %v829 = vunpack.c.l.b16 %v229
    %v830 = vunpack.c.h.b16 %v229
    %v831 = vunpack.c.l.b16 %v230
    %v832 = vunpack.c.h.b16 %v230
    %v833 = vunpack.c.l.b16 %v231
    %v834 = vunpack.c.h.b16 %v231
    %v835 = vunpack.c.l.b16 %v232
    %v836 = vunpack.c.h.b16 %v232
    %v837 = vunpack.c.l.b16 %v233
    %v838 = vunpack.c.h.b16 %v233
    %v839 = vunpack.c.l.b16 %v234
    %v840 = vunpack.c.h.b16 %v234
    %v841 = vunpack.c.l.b16 %v235
    %v842 = vunpack.c.h.b16 %v235
    %v843 = vunpack.c.l.b16 %v236
    %v844 = vunpack.c.h.b16 %v236
    %v845 = vunpack.c.l.b16 %v237
    %v846 = vunpack.c.h.b16 %v237
    %v847 = vunpack.c.l.b16 %v238
    %v848 = vunpack.c.h.b16 %v238
    %v849 = vunpack.c.l.b16 %v239
    %v850 = vunpack.c.h.b16 %v239
    %v851 = vunpack.c.l.b16 %v240
    %v852 = vunpack.c.h.b16 %v240
    %v853 = vpack.c.b16 %v465, %v461
    %v854 = vpack.c.b16 %v466, %v462
    %v855 = vpack.c.b16 %v467, %v463
    %v856 = vpack.c.b16 %v468, %v464
    %v857 = vpack.c.b16 %v473, %v469
    %v858 = vpack.c.b16 %v474, %v470
    %v859 = vpack.c.b16 %v475, %v471
    %v860 = vpack.c.b16 %v476, %v472
    %v861 = vpack.c.b16 %v481, %v477
    %v862 = vpack.c.b16 %v482, %v478
    %v863 = vpack.c.b16 %v483, %v479
    %v864 = vpack.c.b16 %v484, %v480
    %v865 = vpack.c.b16 %v489, %v485
    %v866 = vpack.c.b16 %v490, %v486
    %v867 = vpack.c.b16 %v491, %v487
    %v868 = vpack.c.b16 %v492, %v488
    %v869 = vpack.c.b16 %v497, %v493
    %v870 = vpack.c.b16 %v498, %v494
    %v871 = vpack.c.b16 %v499, %v495
    %v872 = vpack.c.b16 %v500, %v496
    %v873 = vpack.c.b16 %v505, %v501
    %v874 = vpack.c.b16 %v506, %v502
    %v875 = vpack.c.b16 %v507, %v503
    %v876 = vpack.c.b16 %v508, %v504
    %v877 = vpack.c.b16 %v513, %v509
    %v878 = vpack.c.b16 %v514, %v510
    %v879 = vpack.c.b16 %v515, %v511
    %v880 = vpack.c.b16 %v516, %v512
    %v881 = vpack.c.b16 %v521, %v517
    %v882 = vpack.c.b16 %v522, %v518
    %v883 = vpack.c.b16 %v523, %v519
    %v884 = vpack.c.b16 %v524, %v520
    %v885 = vpack.c.b16 %v529, %v525
    %v886 = vpack.c.b16 %v530, %v526
    %v887 = vpack.c.b16 %v531, %v527
    %v888 = vpack.c.b16 %v532, %v528
    %v889 = vpack.c.b16 %v537, %v533
    %v890 = vpack.c.b16 %v538, %v534
    %v891 = vpack.c.b16 %v539, %v535
    %v892 = vpack.c.b16 %v540, %v536
    %v893 = vpack.c.b16 %v545, %v541
    %v894 = vpack.c.b16 %v546, %v542
    %v895 = vpack.c.b16 %v547, %v543
    %v896 = vpack.c.b16 %v548, %v544
    %v897 = vpack.c.b16 %v553, %v549
    %v898 = vpack.c.b16 %v554, %v550
    %v899 = vpack.c.b16 %v555, %v551
    %v900 = vpack.c.b16 %v556, %v552
    %v901 = vpack.c.b16 %v561, %v557
    %v902 = vpack.c.b16 %v562, %v558
    %v903 = vpack.c.b16 %v563, %v559
    %v904 = vpack.c.b16 %v564, %v560
    %v905 = vpack.c.b16 %v569, %v565
    %v906 = vpack.c.b16 %v570, %v566
    %v907 = vpack.c.b16 %v571, %v567
    %v908 = vpack.c.b16 %v572, %v568
    %v909 = vpack.c.b16 %v577, %v573
    %v910 = vpack.c.b16 %v578, %v574
    %v911 = vpack.c.b16 %v579, %v575
    %v912 = vpack.c.b16 %v580, %v576
    %v913 = vpack.c.b16 %v585, %v581
    %v914 = vpack.c.b16 %v586, %v582
    %v915 = vpack.c.b16 %v587, %v583
    %v916 = vpack.c.b16 %v588, %v584
    %v917 = vpack.c.b16 %v593, %v589
    %v918 = vpack.c.b16 %v594, %v590
    %v919 = vpack.c.b16 %v595, %v591
    %v920 = vpack.c.b16 %v596, %v592
    %v921 = vpack.c.b16 %v601, %v597
    %v922 = vpack.c.b16 %v602, %v598
    %v923 = vpack.c.b16 %v603, %v599
    %v924 = vpack.c.b16 %v604, %v600
    %v925 = vpack.c.b16 %v609, %v605
    %v926 = vpack.c.b16 %v610, %v606
    %v927 = vpack.c.b16 %v611, %v607
    %v928 = vpack.c.b16 %v612, %v608
    %v929 = vpack.c.b16 %v617, %v613
    %v930 = vpack.c.b16 %v618, %v614
    %v931 = vpack.c.b16 %v619, %v615
    %v932 = vpack.c.b16 %v620, %v616
    %v933 = vpack.c.b16 %v625, %v621
    %v934 = vpack.c.b16 %v626, %v622
    %v935 = vpack.c.b16 %v627, %v623
    %v936 = vpack.c.b16 %v628, %v624
    %v937 = vpack.c.b16 %v633, %v629
    %v938 = vpack.c.b16 %v634, %v630
    %v939 = vpack.c.b16 %v635, %v631
    %v940 = vpack.c.b16 %v636, %v632
    %v941 = vpack.c.b16 %v641, %v637
    %v942 = vpack.c.b16 %v642, %v638
    %v943 = vpack.c.b16 %v643, %v639
    %v944 = vpack.c.b16 %v644, %v640
    %v945 = vpack.c.b16 %v649, %v645
    %v946 = vpack.c.b16 %v650, %v646
    %v947 = vpack.c.b16 %v651, %v647
    %v948 = vpack.c.b16 %v652, %v648
    %v949 = vpack.c.b16 %v657, %v653
    %v950 = vpack.c.b16 %v658, %v654
    %v951 = vpack.c.b16 %v659, %v655
    %v952 = vpack.c.b16 %v660, %v656
    %v953 = vpack.c.b16 %v665, %v661
    %v954 = vpack.c.b16 %v666, %v662
    %v955 = vpack.c.b16 %v667, %v663
    %v956 = vpack.c.b16 %v668, %v664
    %v957 = vpack.c.b16 %v673, %v669
    %v958 = vpack.c.b16 %v674, %v670
    %v959 = vpack.c.b16 %v675, %v671
    %v960 = vpack.c.b16 %v676, %v672
    %v961 = vpack.c.b16 %v681, %v677
    %v962 = vpack.c.b16 %v682, %v678
    %v963 = vpack.c.b16 %v683, %v679
    %v964 = vpack.c.b16 %v684, %v680
    %v965 = vpack.c.b16 %v689, %v685
    %v966 = vpack.c.b16 %v690, %v686
    %v967 = vpack.c.b16 %v691, %v687
    %v968 = vpack.c.b16 %v692, %v688
    %v969 = vpack.c.b16 %v697, %v693
    %v970 = vpack.c.b16 %v698, %v694
    %v971 = vpack.c.b16 %v699, %v695
    %v972 = vpack.c.b16 %v700, %v696
    %v973 = vpack.c.b16 %v705, %v701
    %v974 = vpack.c.b16 %v706, %v702
    %v975 = vpack.c.b16 %v707, %v703
    %v976 = vpack.c.b16 %v708, %v704
    %v977 = vpack.c.b16 %v713, %v709
    %v978 = vpack.c.b16 %v714, %v710
    %v979 = vpack.c.b16 %v715, %v711
    %v980 = vpack.c.b16 %v716, %v712
    %v981 = vpack.c.b16 %v721, %v717
    %v982 = vpack.c.b16 %v722, %v718
    %v983 = vpack.c.b16 %v723, %v719
    %v984 = vpack.c.b16 %v724, %v720
    %v985 = vpack.c.b16 %v729, %v725
    %v986 = vpack.c.b16 %v730, %v726
    %v987 = vpack.c.b16 %v731, %v727
    %v988 = vpack.c.b16 %v732, %v728
    %v989 = vpack.c.b16 %v737, %v733
    %v990 = vpack.c.b16 %v738, %v734
    %v991 = vpack.c.b16 %v739, %v735
    %v992 = vpack.c.b16 %v740, %v736
    %v993 = vpack.c.b16 %v745, %v741
    %v994 = vpack.c.b16 %v746, %v742
    %v995 = vpack.c.b16 %v747, %v743
    %v996 = vpack.c.b16 %v748, %v744
    %v997 = vpack.c.b16 %v753, %v749
    %v998 = vpack.c.b16 %v754, %v750
    %v999 = vpack.c.b16 %v755, %v751
    %v1000 = vpack.c.b16 %v756, %v752
    %v1001 = vpack.c.b16 %v761, %v757
    %v1002 = vpack.c.b16 %v762, %v758
    %v1003 = vpack.c.b16 %v763, %v759
    %v1004 = vpack.c.b16 %v764, %v760
    %v1005 = vpack.c.b16 %v769, %v765
    %v1006 = vpack.c.b16 %v770, %v766
    %v1007 = vpack.c.b16 %v771, %v767
    %v1008 = vpack.c.b16 %v772, %v768
    %v1009 = vpack.c.b16 %v777, %v773
    %v1010 = vpack.c.b16 %v778, %v774
    %v1011 = vpack.c.b16 %v779, %v775
    %v1012 = vpack.c.b16 %v780, %v776
    %v1013 = vpack.c.b16 %v785, %v781
    %v1014 = vpack.c.b16 %v786, %v782
    %v1015 = vpack.c.b16 %v787, %v783
    %v1016 = vpack.c.b16 %v788, %v784
    %v1017 = vpack.c.b16 %v793, %v789
    %v1018 = vpack.c.b16 %v794, %v790
    %v1019 = vpack.c.b16 %v795, %v791
    %v1020 = vpack.c.b16 %v796, %v792
    %v1021 = vpack.c.b16 %v801, %v797
    %v1022 = vpack.c.b16 %v802, %v798
    %v1023 = vpack.c.b16 %v803, %v799
    %v1024 = vpack.c.b16 %v804, %v800
    %v1025 = vpack.c.b16 %v809, %v805
    %v1026 = vpack.c.b16 %v810, %v806
    %v1027 = vpack.c.b16 %v811, %v807
    %v1028 = vpack.c.b16 %v812, %v808
    %v1029 = vpack.c.b16 %v817, %v813
    %v1030 = vpack.c.b16 %v818, %v814
    %v1031 = vpack.c.b16 %v819, %v815
    %v1032 = vpack.c.b16 %v820, %v816
    %v1033 = vpack.c.b16 %v825, %v821
    %v1034 = vpack.c.b16 %v826, %v822
    %v1035 = vpack.c.b16 %v827, %v823
    %v1036 = vpack.c.b16 %v828, %v824
    %v1037 = vpack.c.b16 %v833, %v829
    %v1038 = vpack.c.b16 %v834, %v830
    %v1039 = vpack.c.b16 %v835, %v831
    %v1040 = vpack.c.b16 %v836, %v832
    %v1041 = vpack.c.b16 %v841, %v837
    %v1042 = vpack.c.b16 %v842, %v838
    %v1043 = vpack.c.b16 %v843, %v839
    %v1044 = vpack.c.b16 %v844, %v840
    %v1045 = vpack.c.b16 %v849, %v845
    %v1046 = vpack.c.b16 %v850, %v846
    %v1047 = vpack.c.b16 %v851, %v847
    %v1048 = vpack.c.b16 %v852, %v848
    %vm1245 = vcmask 130048
    %v1247 = vsel %vm1245, %v258, 0
    %1249 = vmatpush.bf16.msra.mxu0 %v881
    %1250 = vmatpush.bf16.msra.mxu0 %v877
    %1251 = vmatpush.bf16.msra.mxu0 %v873
    %1252 = vmatpush.bf16.msra.mxu0 %v869
    %1253 = vmatpush.bf16.msra.mxu0 %v865
    %1254 = vmatpush.bf16.msra.mxu0 %v861
    %1255 = vmatpush.bf16.msra.mxu0 %v857
    %1256 = vmatpush.bf16.msra.mxu0 %v853
    %1257 = vmatmul.bf16.gmra.mxu0 %v252
    %v1258 = vpop.f32.mrf.mxu0
    %v1259 = vadd.f32 0.0, %v1258
    %v1260 = vpop.f32.mrf.mxu0
    %1261 = vdwg.mxu0
    %1262 = vmatpush.bf16.msra.mxu0 %v913
    %1263 = vmatpush.bf16.msra.mxu0 %v909
    %1264 = vmatpush.bf16.msra.mxu0 %v905
    %1265 = vmatpush.bf16.msra.mxu0 %v901
    %1266 = vmatpush.bf16.msra.mxu0 %v897
    %1267 = vmatpush.bf16.msra.mxu0 %v893
    %1268 = vmatpush.bf16.msra.mxu0 %v889
    %1269 = vmatpush.bf16.msra.mxu0 %v885
    %1270 = vmatmul.bf16.gmra.mxu0 %v253
    %v1271 = vpop.f32.mrf.mxu0
    %v1272 = vadd.f32 %v1259, %v1271
    %v1273 = vpop.f32.mrf.mxu0
    %1274 = vdwg.mxu0
    %1275 = vmatpush.bf16.msra.mxu0 %v945
    %1276 = vmatpush.bf16.msra.mxu0 %v941
    %1277 = vmatpush.bf16.msra.mxu0 %v937
    %1278 = vmatpush.bf16.msra.mxu0 %v933
    %1279 = vmatpush.bf16.msra.mxu0 %v929
    %1280 = vmatpush.bf16.msra.mxu0 %v925
    %1281 = vmatpush.bf16.msra.mxu0 %v921
    %1282 = vmatpush.bf16.msra.mxu0 %v917
    %1283 = vmatmul.bf16.gmra.mxu0 %v254
    %v1284 = vpop.f32.mrf.mxu0
    %v1285 = vadd.f32 %v1272, %v1284
    %v1286 = vpop.f32.mrf.mxu0
    %1287 = vdwg.mxu0
    %1288 = vmatpush.bf16.msra.mxu0 %v977
    %1289 = vmatpush.bf16.msra.mxu0 %v973
    %1290 = vmatpush.bf16.msra.mxu0 %v969
    %1291 = vmatpush.bf16.msra.mxu0 %v965
    %1292 = vmatpush.bf16.msra.mxu0 %v961
    %1293 = vmatpush.bf16.msra.mxu0 %v957
    %1294 = vmatpush.bf16.msra.mxu0 %v953
    %1295 = vmatpush.bf16.msra.mxu0 %v949
    %1296 = vmatmul.bf16.gmra.mxu0 %v255
    %v1297 = vpop.f32.mrf.mxu0
    %v1298 = vadd.f32 %v1285, %v1297
    %v1299 = vpop.f32.mrf.mxu0
    %1300 = vdwg.mxu0
    %1301 = vmatpush.bf16.msra.mxu0 %v1009
    %1302 = vmatpush.bf16.msra.mxu0 %v1005
    %1303 = vmatpush.bf16.msra.mxu0 %v1001
    %1304 = vmatpush.bf16.msra.mxu0 %v997
    %1305 = vmatpush.bf16.msra.mxu0 %v993
    %1306 = vmatpush.bf16.msra.mxu0 %v989
    %1307 = vmatpush.bf16.msra.mxu0 %v985
    %1308 = vmatpush.bf16.msra.mxu0 %v981
    %1309 = vmatmul.bf16.gmra.mxu0 %v256
    %v1310 = vpop.f32.mrf.mxu0
    %v1311 = vadd.f32 %v1298, %v1310
    %v1312 = vpop.f32.mrf.mxu0
    %1313 = vdwg.mxu0
    %1314 = vmatpush.bf16.msra.mxu0 %v1041
    %1315 = vmatpush.bf16.msra.mxu0 %v1037
    %1316 = vmatpush.bf16.msra.mxu0 %v1033
    %1317 = vmatpush.bf16.msra.mxu0 %v1029
    %1318 = vmatpush.bf16.msra.mxu0 %v1025
    %1319 = vmatpush.bf16.msra.mxu0 %v1021
    %1320 = vmatpush.bf16.msra.mxu0 %v1017
    %1321 = vmatpush.bf16.msra.mxu0 %v1013
    %1322 = vmatmul.bf16.gmra.mxu0 %v257
    %v1323 = vpop.f32.mrf.mxu0
    %v1324 = vadd.f32 %v1311, %v1323
    %v1325 = vpop.f32.mrf.mxu0
    %1326 = vdwg.mxu0
    %1327 = vmatpush.bf16.msra.mxu0 0
    %1328 = vmatpush.bf16.msra.mxu0 0
    %1329 = vmatpush.bf16.msra.mxu0 0
    %1330 = vmatpush.bf16.msra.mxu0 0
    %1331 = vmatpush.bf16.msra.mxu0 0
    %1332 = vmatpush.bf16.msra.mxu0 0
    %1333 = vmatpush.bf16.msra.mxu0 0
    %1334 = vmatpush.bf16.msra.mxu0 %v1045
    %1335 = vmatmul.bf16.gmra.mxu0 %v1247
    %v1336 = vpop.f32.mrf.mxu0
    %v1337 = vadd.f32 %v1324, %v1336
    %v1338 = vpop.f32.mrf.mxu0
    %1339 = vdwg.mxu0
    %1340 = vmatpush.bf16.msra.mxu0 %v882
    %1341 = vmatpush.bf16.msra.mxu0 %v878
    %1342 = vmatpush.bf16.msra.mxu0 %v874
    %1343 = vmatpush.bf16.msra.mxu0 %v870
    %1344 = vmatpush.bf16.msra.mxu0 %v866
    %1345 = vmatpush.bf16.msra.mxu0 %v862
    %1346 = vmatpush.bf16.msra.mxu0 %v858
    %1347 = vmatpush.bf16.msra.mxu0 %v854
    %1348 = vmatmul.bf16.gmra.mxu0 %v252
    %v1349 = vpop.f32.mrf.mxu0
    %v1350 = vadd.f32 0.0, %v1349
    %v1351 = vpop.f32.mrf.mxu0
    %1352 = vdwg.mxu0
    %1353 = vmatpush.bf16.msra.mxu0 %v914
    %1354 = vmatpush.bf16.msra.mxu0 %v910
    %1355 = vmatpush.bf16.msra.mxu0 %v906
    %1356 = vmatpush.bf16.msra.mxu0 %v902
    %1357 = vmatpush.bf16.msra.mxu0 %v898
    %1358 = vmatpush.bf16.msra.mxu0 %v894
    %1359 = vmatpush.bf16.msra.mxu0 %v890
    %1360 = vmatpush.bf16.msra.mxu0 %v886
    %1361 = vmatmul.bf16.gmra.mxu0 %v253
    %v1362 = vpop.f32.mrf.mxu0
    %v1363 = vadd.f32 %v1350, %v1362
    %v1364 = vpop.f32.mrf.mxu0
    %1365 = vdwg.mxu0
    %1366 = vmatpush.bf16.msra.mxu0 %v946
    %1367 = vmatpush.bf16.msra.mxu0 %v942
    %1368 = vmatpush.bf16.msra.mxu0 %v938
    %1369 = vmatpush.bf16.msra.mxu0 %v934
    %1370 = vmatpush.bf16.msra.mxu0 %v930
    %1371 = vmatpush.bf16.msra.mxu0 %v926
    %1372 = vmatpush.bf16.msra.mxu0 %v922
    %1373 = vmatpush.bf16.msra.mxu0 %v918
    %1374 = vmatmul.bf16.gmra.mxu0 %v254
    %v1375 = vpop.f32.mrf.mxu0
    %v1376 = vadd.f32 %v1363, %v1375
    %v1377 = vpop.f32.mrf.mxu0
    %1378 = vdwg.mxu0
    %1379 = vmatpush.bf16.msra.mxu0 %v978
    %1380 = vmatpush.bf16.msra.mxu0 %v974
    %1381 = vmatpush.bf16.msra.mxu0 %v970
    %1382 = vmatpush.bf16.msra.mxu0 %v966
    %1383 = vmatpush.bf16.msra.mxu0 %v962
    %1384 = vmatpush.bf16.msra.mxu0 %v958
    %1385 = vmatpush.bf16.msra.mxu0 %v954
    %1386 = vmatpush.bf16.msra.mxu0 %v950
    %1387 = vmatmul.bf16.gmra.mxu0 %v255
    %v1388 = vpop.f32.mrf.mxu0
    %v1389 = vadd.f32 %v1376, %v1388
    %v1390 = vpop.f32.mrf.mxu0
    %1391 = vdwg.mxu0
    %1392 = vmatpush.bf16.msra.mxu0 %v1010
    %1393 = vmatpush.bf16.msra.mxu0 %v1006
    %1394 = vmatpush.bf16.msra.mxu0 %v1002
    %1395 = vmatpush.bf16.msra.mxu0 %v998
    %1396 = vmatpush.bf16.msra.mxu0 %v994
    %1397 = vmatpush.bf16.msra.mxu0 %v990
    %1398 = vmatpush.bf16.msra.mxu0 %v986
    %1399 = vmatpush.bf16.msra.mxu0 %v982
    %1400 = vmatmul.bf16.gmra.mxu0 %v256
    %v1401 = vpop.f32.mrf.mxu0
    %v1402 = vadd.f32 %v1389, %v1401
    %v1403 = vpop.f32.mrf.mxu0
    %1404 = vdwg.mxu0
    %1405 = vmatpush.bf16.msra.mxu0 %v1042
    %1406 = vmatpush.bf16.msra.mxu0 %v1038
    %1407 = vmatpush.bf16.msra.mxu0 %v1034
    %1408 = vmatpush.bf16.msra.mxu0 %v1030
    %1409 = vmatpush.bf16.msra.mxu0 %v1026
    %1410 = vmatpush.bf16.msra.mxu0 %v1022
    %1411 = vmatpush.bf16.msra.mxu0 %v1018
    %1412 = vmatpush.bf16.msra.mxu0 %v1014
    %1413 = vmatmul.bf16.gmra.mxu0 %v257
    %v1414 = vpop.f32.mrf.mxu0
    %v1415 = vadd.f32 %v1402, %v1414
    %v1416 = vpop.f32.mrf.mxu0
    %1417 = vdwg.mxu0
    %1418 = vmatpush.bf16.msra.mxu0 0
    %1419 = vmatpush.bf16.msra.mxu0 0
    %1420 = vmatpush.bf16.msra.mxu0 0
    %1421 = vmatpush.bf16.msra.mxu0 0
    %1422 = vmatpush.bf16.msra.mxu0 0
    %1423 = vmatpush.bf16.msra.mxu0 0
    %1424 = vmatpush.bf16.msra.mxu0 0
    %1425 = vmatpush.bf16.msra.mxu0 %v1046
    %1426 = vmatmul.bf16.gmra.mxu0 %v1247
    %v1427 = vpop.f32.mrf.mxu0
    %v1428 = vadd.f32 %v1415, %v1427
    %v1429 = vpop.f32.mrf.mxu0
    %1430 = vdwg.mxu0
    %1431 = vmatpush.bf16.msra.mxu0 %v883
    %1432 = vmatpush.bf16.msra.mxu0 %v879
    %1433 = vmatpush.bf16.msra.mxu0 %v875
    %1434 = vmatpush.bf16.msra.mxu0 %v871
    %1435 = vmatpush.bf16.msra.mxu0 %v867
    %1436 = vmatpush.bf16.msra.mxu0 %v863
    %1437 = vmatpush.bf16.msra.mxu0 %v859
    %1438 = vmatpush.bf16.msra.mxu0 %v855
    %1439 = vmatmul.bf16.gmra.mxu0 %v252
    %v1440 = vpop.f32.mrf.mxu0
    %v1441 = vadd.f32 0.0, %v1440
    %v1442 = vpop.f32.mrf.mxu0
    %1443 = vdwg.mxu0
    %1444 = vmatpush.bf16.msra.mxu0 %v915
    %1445 = vmatpush.bf16.msra.mxu0 %v911
    %1446 = vmatpush.bf16.msra.mxu0 %v907
    %1447 = vmatpush.bf16.msra.mxu0 %v903
    %1448 = vmatpush.bf16.msra.mxu0 %v899
    %1449 = vmatpush.bf16.msra.mxu0 %v895
    %1450 = vmatpush.bf16.msra.mxu0 %v891
    %1451 = vmatpush.bf16.msra.mxu0 %v887
    %1452 = vmatmul.bf16.gmra.mxu0 %v253
    %v1453 = vpop.f32.mrf.mxu0
    %v1454 = vadd.f32 %v1441, %v1453
    %v1455 = vpop.f32.mrf.mxu0
    %1456 = vdwg.mxu0
    %1457 = vmatpush.bf16.msra.mxu0 %v947
    %1458 = vmatpush.bf16.msra.mxu0 %v943
    %1459 = vmatpush.bf16.msra.mxu0 %v939
    %1460 = vmatpush.bf16.msra.mxu0 %v935
    %1461 = vmatpush.bf16.msra.mxu0 %v931
    %1462 = vmatpush.bf16.msra.mxu0 %v927
    %1463 = vmatpush.bf16.msra.mxu0 %v923
    %1464 = vmatpush.bf16.msra.mxu0 %v919
    %1465 = vmatmul.bf16.gmra.mxu0 %v254
    %v1466 = vpop.f32.mrf.mxu0
    %v1467 = vadd.f32 %v1454, %v1466
    %v1468 = vpop.f32.mrf.mxu0
    %1469 = vdwg.mxu0
    %1470 = vmatpush.bf16.msra.mxu0 %v979
    %1471 = vmatpush.bf16.msra.mxu0 %v975
    %1472 = vmatpush.bf16.msra.mxu0 %v971
    %1473 = vmatpush.bf16.msra.mxu0 %v967
    %1474 = vmatpush.bf16.msra.mxu0 %v963
    %1475 = vmatpush.bf16.msra.mxu0 %v959
    %1476 = vmatpush.bf16.msra.mxu0 %v955
    %1477 = vmatpush.bf16.msra.mxu0 %v951
    %1478 = vmatmul.bf16.gmra.mxu0 %v255
    %v1479 = vpop.f32.mrf.mxu0
    %v1480 = vadd.f32 %v1467, %v1479
    %v1481 = vpop.f32.mrf.mxu0
    %1482 = vdwg.mxu0
    %1483 = vmatpush.bf16.msra.mxu0 %v1011
    %1484 = vmatpush.bf16.msra.mxu0 %v1007
    %1485 = vmatpush.bf16.msra.mxu0 %v1003
    %1486 = vmatpush.bf16.msra.mxu0 %v999
    %1487 = vmatpush.bf16.msra.mxu0 %v995
    %1488 = vmatpush.bf16.msra.mxu0 %v991
    %1489 = vmatpush.bf16.msra.mxu0 %v987
    %1490 = vmatpush.bf16.msra.mxu0 %v983
    %1491 = vmatmul.bf16.gmra.mxu0 %v256
    %v1492 = vpop.f32.mrf.mxu0
    %v1493 = vadd.f32 %v1480, %v1492
    %v1494 = vpop.f32.mrf.mxu0
    %1495 = vdwg.mxu0
    %1496 = vmatpush.bf16.msra.mxu0 %v1043
    %1497 = vmatpush.bf16.msra.mxu0 %v1039
    %1498 = vmatpush.bf16.msra.mxu0 %v1035
    %1499 = vmatpush.bf16.msra.mxu0 %v1031
    %1500 = vmatpush.bf16.msra.mxu0 %v1027
    %1501 = vmatpush.bf16.msra.mxu0 %v1023
    %1502 = vmatpush.bf16.msra.mxu0 %v1019
    %1503 = vmatpush.bf16.msra.mxu0 %v1015
    %1504 = vmatmul.bf16.gmra.mxu0 %v257
    %v1505 = vpop.f32.mrf.mxu0
    %v1506 = vadd.f32 %v1493, %v1505
    %v1507 = vpop.f32.mrf.mxu0
    %1508 = vdwg.mxu0
    %1509 = vmatpush.bf16.msra.mxu0 0
    %1510 = vmatpush.bf16.msra.mxu0 0
    %1511 = vmatpush.bf16.msra.mxu0 0
    %1512 = vmatpush.bf16.msra.mxu0 0
    %1513 = vmatpush.bf16.msra.mxu0 0
    %1514 = vmatpush.bf16.msra.mxu0 0
    %1515 = vmatpush.bf16.msra.mxu0 0
    %1516 = vmatpush.bf16.msra.mxu0 %v1047
    %1517 = vmatmul.bf16.gmra.mxu0 %v1247
    %v1518 = vpop.f32.mrf.mxu0
    %v1519 = vadd.f32 %v1506, %v1518
    %v1520 = vpop.f32.mrf.mxu0
    %1521 = vdwg.mxu0
    %1522 = vmatpush.bf16.msra.mxu0 %v884
    %1523 = vmatpush.bf16.msra.mxu0 %v880
    %1524 = vmatpush.bf16.msra.mxu0 %v876
    %1525 = vmatpush.bf16.msra.mxu0 %v872
    %1526 = vmatpush.bf16.msra.mxu0 %v868
    %1527 = vmatpush.bf16.msra.mxu0 %v864
    %1528 = vmatpush.bf16.msra.mxu0 %v860
    %1529 = vmatpush.bf16.msra.mxu0 %v856
    %1530 = vmatmul.bf16.gmra.mxu0 %v252
    %v1531 = vpop.f32.mrf.mxu0
    %v1532 = vadd.f32 0.0, %v1531
    %v1533 = vpop.f32.mrf.mxu0
    %1534 = vdwg.mxu0
    %1535 = vmatpush.bf16.msra.mxu0 %v916
    %1536 = vmatpush.bf16.msra.mxu0 %v912
    %1537 = vmatpush.bf16.msra.mxu0 %v908
    %1538 = vmatpush.bf16.msra.mxu0 %v904
    %1539 = vmatpush.bf16.msra.mxu0 %v900
    %1540 = vmatpush.bf16.msra.mxu0 %v896
    %1541 = vmatpush.bf16.msra.mxu0 %v892
    %1542 = vmatpush.bf16.msra.mxu0 %v888
    %1543 = vmatmul.bf16.gmra.mxu0 %v253
    %v1544 = vpop.f32.mrf.mxu0
    %v1545 = vadd.f32 %v1532, %v1544
    %v1546 = vpop.f32.mrf.mxu0
    %1547 = vdwg.mxu0
    %1548 = vmatpush.bf16.msra.mxu0 %v948
    %1549 = vmatpush.bf16.msra.mxu0 %v944
    %1550 = vmatpush.bf16.msra.mxu0 %v940
    %1551 = vmatpush.bf16.msra.mxu0 %v936
    %1552 = vmatpush.bf16.msra.mxu0 %v932
    %1553 = vmatpush.bf16.msra.mxu0 %v928
    %1554 = vmatpush.bf16.msra.mxu0 %v924
    %1555 = vmatpush.bf16.msra.mxu0 %v920
    %1556 = vmatmul.bf16.gmra.mxu0 %v254
    %v1557 = vpop.f32.mrf.mxu0
    %v1558 = vadd.f32 %v1545, %v1557
    %v1559 = vpop.f32.mrf.mxu0
    %1560 = vdwg.mxu0
    %1561 = vmatpush.bf16.msra.mxu0 %v980
    %1562 = vmatpush.bf16.msra.mxu0 %v976
    %1563 = vmatpush.bf16.msra.mxu0 %v972
    %1564 = vmatpush.bf16.msra.mxu0 %v968
    %1565 = vmatpush.bf16.msra.mxu0 %v964
    %1566 = vmatpush.bf16.msra.mxu0 %v960
    %1567 = vmatpush.bf16.msra.mxu0 %v956
    %1568 = vmatpush.bf16.msra.mxu0 %v952
    %1569 = vmatmul.bf16.gmra.mxu0 %v255
    %v1570 = vpop.f32.mrf.mxu0
    %v1571 = vadd.f32 %v1558, %v1570
    %v1572 = vpop.f32.mrf.mxu0
    %1573 = vdwg.mxu0
    %1574 = vmatpush.bf16.msra.mxu0 %v1012
    %1575 = vmatpush.bf16.msra.mxu0 %v1008
    %1576 = vmatpush.bf16.msra.mxu0 %v1004
    %1577 = vmatpush.bf16.msra.mxu0 %v1000
    %1578 = vmatpush.bf16.msra.mxu0 %v996
    %1579 = vmatpush.bf16.msra.mxu0 %v992
    %1580 = vmatpush.bf16.msra.mxu0 %v988
    %1581 = vmatpush.bf16.msra.mxu0 %v984
    %1582 = vmatmul.bf16.gmra.mxu0 %v256
    %v1583 = vpop.f32.mrf.mxu0
    %v1584 = vadd.f32 %v1571, %v1583
    %v1585 = vpop.f32.mrf.mxu0
    %1586 = vdwg.mxu0
    %1587 = vmatpush.bf16.msra.mxu0 %v1044
    %1588 = vmatpush.bf16.msra.mxu0 %v1040
    %1589 = vmatpush.bf16.msra.mxu0 %v1036
    %1590 = vmatpush.bf16.msra.mxu0 %v1032
    %1591 = vmatpush.bf16.msra.mxu0 %v1028
    %1592 = vmatpush.bf16.msra.mxu0 %v1024
    %1593 = vmatpush.bf16.msra.mxu0 %v1020
    %1594 = vmatpush.bf16.msra.mxu0 %v1016
    %1595 = vmatmul.bf16.gmra.mxu0 %v257
    %v1596 = vpop.f32.mrf.mxu0
    %v1597 = vadd.f32 %v1584, %v1596
    %v1598 = vpop.f32.mrf.mxu0
    %1599 = vdwg.mxu0
    %1600 = vmatpush.bf16.msra.mxu0 0
    %1601 = vmatpush.bf16.msra.mxu0 0
    %1602 = vmatpush.bf16.msra.mxu0 0
    %1603 = vmatpush.bf16.msra.mxu0 0
    %1604 = vmatpush.bf16.msra.mxu0 0
    %1605 = vmatpush.bf16.msra.mxu0 0
    %1606 = vmatpush.bf16.msra.mxu0 0
    %1607 = vmatpush.bf16.msra.mxu0 %v1048
    %1608 = vmatmul.bf16.gmra.mxu0 %v1247
    %v1609 = vpop.f32.mrf.mxu0
    %v1610 = vadd.f32 %v1597, %v1609
    %v1611 = vpop.f32.mrf.mxu0
    %1612 = vdwg.mxu0
    %v1613 = vrot.slane %v1337, 4
    %v1614 = vadd.f32 %v1337, %v1613
    %v1615 = vrot.slane %v1614, 2
    %v1616 = vadd.f32 %v1614, %v1615
    %v1617 = vrot.slane %v1616, 1
    %v1618 = vadd.f32 %v1616, %v1617
    %v1619 = vrot.slane %v1428, 4
    %v1620 = vadd.f32 %v1428, %v1619
    %v1621 = vrot.slane %v1620, 2
    %v1622 = vadd.f32 %v1620, %v1621
    %v1623 = vrot.slane %v1622, 1
    %v1624 = vadd.f32 %v1622, %v1623
    %v1625 = vrot.slane %v1519, 4
    %v1626 = vadd.f32 %v1519, %v1625
    %v1627 = vrot.slane %v1626, 2
    %v1628 = vadd.f32 %v1626, %v1627
    %v1629 = vrot.slane %v1628, 1
    %v1630 = vadd.f32 %v1628, %v1629
    %v1631 = vrot.slane %v1610, 4
    %v1632 = vadd.f32 %v1610, %v1631
    %v1633 = vrot.slane %v1632, 2
    %v1634 = vadd.f32 %v1632, %v1633
    %v1635 = vrot.slane %v1634, 1
    %v1636 = vadd.f32 %v1634, %v1635
    %v1637 = vrcp.pop 8.0
    %v1638 = vmul.f32 8.0, %v1637
    %v1639 = vsub.f32 1.0, %v1638
    %v1640 = vmul.f32 %v1637, %v1639
    %v1641 = vadd.f32 %v1637, %v1640
    %vm1642 = vweird.f32 %v1637
    %v1643 = vsel %vm1642, %v1637, %v1641
    %v1644 = vmul.f32 %v1618, %v1643
    %v1645 = vmul.f32 %v1624, %v1643
    %v1646 = vmul.f32 %v1630, %v1643
    %v1647 = vmul.f32 %v1636, %v1643
    %v1648 = vsub.f32 %v1337, %v1644
    %v1649 = vsub.f32 %v1428, %v1645
    %v1650 = vsub.f32 %v1519, %v1646
    %v1651 = vsub.f32 %v1610, %v1647
    %v1652 = vmul.f32 %v1648, %v1648
    %v1653 = vmul.f32 %v1649, %v1649
    %v1654 = vmul.f32 %v1650, %v1650
    %v1655 = vmul.f32 %v1651, %v1651
    %v1656 = vrot.slane %v1652, 4
    %v1657 = vadd.f32 %v1652, %v1656
    %v1658 = vrot.slane %v1657, 2
    %v1659 = vadd.f32 %v1657, %v1658
    %v1660 = vrot.slane %v1659, 1
    %v1661 = vadd.f32 %v1659, %v1660
    %v1662 = vrot.slane %v1653, 4
    %v1663 = vadd.f32 %v1653, %v1662
    %v1664 = vrot.slane %v1663, 2
    %v1665 = vadd.f32 %v1663, %v1664
    %v1666 = vrot.slane %v1665, 1
    %v1667 = vadd.f32 %v1665, %v1666
    %v1668 = vrot.slane %v1654, 4
    %v1669 = vadd.f32 %v1654, %v1668
    %v1670 = vrot.slane %v1669, 2
    %v1671 = vadd.f32 %v1669, %v1670
    %v1672 = vrot.slane %v1671, 1
    %v1673 = vadd.f32 %v1671, %v1672
    %v1674 = vrot.slane %v1655, 4
    %v1675 = vadd.f32 %v1655, %v1674
    %v1676 = vrot.slane %v1675, 2
    %v1677 = vadd.f32 %v1675, %v1676
    %v1678 = vrot.slane %v1677, 1
    %v1679 = vadd.f32 %v1677, %v1678
    %v1680 = vmul.f32 %v1661, %v1643
    %v1681 = vmul.f32 %v1667, %v1643
    %v1682 = vmul.f32 %v1673, %v1643
    %v1683 = vmul.f32 %v1679, %v1643
    %v1684 = vld [vmem:[%s2] sm:$0xf]
    %v1685 = vadd.f32 %v1680, 1e-05
    %v1686 = vadd.f32 %v1681, 1e-05
    %v1687 = vadd.f32 %v1682, 1e-05
    %v1688 = vadd.f32 %v1683, 1e-05
    %v1689 = vrsqrt.pop %v1685
    %v1690 = vmul.f32 %v1689, %v1685
    %v1691 = vmul.f32 %v1690, %v1689
    %v1692 = vmul.f32 0.5, %v1691
    %v1693 = vsub.f32 1.5, %v1692
    %v1694 = vmul.f32 %v1689, %v1693
    %vm1695 = vweird.f32 %v1685
    %vm1696 = vweird.f32 %v1689
    %vm1697 = vmor %vm1695, %vm1696
    %v1698 = vsel %vm1697, %v1689, %v1694
    %v1699 = vrsqrt.pop %v1686
    %v1700 = vmul.f32 %v1699, %v1686
    %v1701 = vmul.f32 %v1700, %v1699
    %v1702 = vmul.f32 0.5, %v1701
    %v1703 = vsub.f32 1.5, %v1702
    %v1704 = vmul.f32 %v1699, %v1703
    %vm1705 = vweird.f32 %v1686
    %vm1706 = vweird.f32 %v1699
    %vm1707 = vmor %vm1705, %vm1706
    %v1708 = vsel %vm1707, %v1699, %v1704
    %v1709 = vrsqrt.pop %v1687
    %v1710 = vmul.f32 %v1709, %v1687
    %v1711 = vmul.f32 %v1710, %v1709
    %v1712 = vmul.f32 0.5, %v1711
    %v1713 = vsub.f32 1.5, %v1712
    %v1714 = vmul.f32 %v1709, %v1713
    %vm1715 = vweird.f32 %v1687
    %vm1716 = vweird.f32 %v1709
    %vm1717 = vmor %vm1715, %vm1716
    %v1718 = vsel %vm1717, %v1709, %v1714
    %v1719 = vrsqrt.pop %v1688
    %v1720 = vmul.f32 %v1719, %v1688
    %v1721 = vmul.f32 %v1720, %v1719
    %v1722 = vmul.f32 0.5, %v1721
    %v1723 = vsub.f32 1.5, %v1722
    %v1724 = vmul.f32 %v1719, %v1723
    %vm1725 = vweird.f32 %v1688
    %vm1726 = vweird.f32 %v1719
    %vm1727 = vmor %vm1725, %vm1726
    %v1728 = vsel %vm1727, %v1719, %v1724
    %v1733 = vrot.slane %v1708, 7
    %v1734 = vrot.slane %v1718, 6
    %v1735 = vrot.slane %v1728, 5
    %vm1736 = vcmask 1040384
    %v1737 = vsel %vm1736, %v1698, %v1733
    %vm1738 = vcmask 1042434
    %v1739 = vsel %vm1738, %v1734, %v1735
    %vm1740 = vcmask 1041408
    %v1741 = vsel %vm1740, %v1737, %v1739
    %v1743 = vmul.f32 %v1684, %v1741
    %v1745 = vperm.slane %v1743, 0
    %v1746 = vperm.slane %v1743, 1
    %v1747 = vperm.slane %v1743, 2
    %v1748 = vperm.slane %v1743, 3
    %v1753 = vmul.f32 %v1648, %v1745
    %v1754 = vmul.f32 %v1649, %v1746
    %v1755 = vmul.f32 %v1650, %v1747
    %v1756 = vmul.f32 %v1651, %v1748
    %v1757 = vld [vmem:[%s3] sm:$0xf]
    %v1759 = vperm.slane %v1757, 0
    %v1760 = vperm.slane %v1757, 1
    %v1761 = vperm.slane %v1757, 2
    %v1762 = vperm.slane %v1757, 3
    %v1767 = vadd.f32 %v1753, %v1759
    %v1768 = vadd.f32 %v1754, %v1760
    %v1769 = vadd.f32 %v1755, %v1761
    %v1770 = vadd.f32 %v1756, %v1762
    %v1771 = vmax.f32 %v1767, 0.0
    %v1772 = vmax.f32 %v1768, 0.0
    %v1773 = vmax.f32 %v1769, 0.0
    %v1774 = vmax.f32 %v1770, 0.0
    %v1775 = vpack.c.bf16 %v1771, %v1771
    %v1776 = vpack.c.bf16 %v1772, %v1772
    %v1777 = vpack.c.bf16 %v1773, %v1773
    %v1778 = vpack.c.bf16 %v1774, %v1774
    %v1779 = vld [vmem:[%s4] sm:$0xf]
    %v1780 = vld [vmem:[%s4 + $0x4] sm:$0xf]
    %v1781 = vld [vmem:[%s4 + $0x8] sm:$0xf]
    %v1782 = vld [vmem:[%s4 + $0xc] sm:$0xf]
    %v1783 = vld [vmem:[%s4 + $0x10] sm:$0xf]
    %v1784 = vld [vmem:[%s4 + $0x14] sm:$0xf]
    %v1785 = vld [vmem:[%s4 + $0x18] sm:$0xf]
    %v1786 = vld [vmem:[%s4 + $0x1c] sm:$0xf]
    %v1787 = vld [vmem:[%s4 + $0x20] sm:$0xf]
    %v1788 = vld [vmem:[%s4 + $0x24] sm:$0xf]
    %v1789 = vld [vmem:[%s4 + $0x28] sm:$0xf]
    %v1790 = vld [vmem:[%s4 + $0x2c] sm:$0xf]
    %v1791 = vld [vmem:[%s4 + $0x30] sm:$0xf]
    %v1792 = vld [vmem:[%s4 + $0x34] sm:$0xf]
    %v1793 = vld [vmem:[%s4 + $0x38] sm:$0xf]
    %v1794 = vld [vmem:[%s4 + $0x3c] sm:$0xf]
    %v1795 = vld [vmem:[%s4 + $0x40] sm:$0xf]
    %v1796 = vld [vmem:[%s4 + $0x44] sm:$0xf]
    %v1797 = vld [vmem:[%s4 + $0x48] sm:$0xf]
    %v1798 = vld [vmem:[%s4 + $0x4c] sm:$0xf]
    %v1799 = vld [vmem:[%s4 + $0x50] sm:$0xf]
    %v1800 = vld [vmem:[%s4 + $0x54] sm:$0xf]
    %v1801 = vld [vmem:[%s4 + $0x58] sm:$0xf]
    %v1802 = vld [vmem:[%s4 + $0x5c] sm:$0xf]
    %v1803 = vld [vmem:[%s4 + $0x60] sm:$0xf]
    %v1804 = vld [vmem:[%s4 + $0x64] sm:$0xf]
    %v1805 = vld [vmem:[%s4 + $0x68] sm:$0xf]
    %v1806 = vld [vmem:[%s4 + $0x6c] sm:$0xf]
    %v1807 = vld [vmem:[%s4 + $0x70] sm:$0xf]
    %v1808 = vld [vmem:[%s4 + $0x74] sm:$0xf]
    %v1809 = vld [vmem:[%s4 + $0x78] sm:$0xf]
    %v1810 = vld [vmem:[%s4 + $0x7c] sm:$0xf]
    %v1811 = vld [vmem:[%s4 + $0x80] sm:$0xf]
    %v1812 = vld [vmem:[%s4 + $0x84] sm:$0xf]
    %v1813 = vld [vmem:[%s4 + $0x88] sm:$0xf]
    %v1814 = vld [vmem:[%s4 + $0x8c] sm:$0xf]
    %v1815 = vld [vmem:[%s4 + $0x90] sm:$0xf]
    %v1816 = vld [vmem:[%s4 + $0x94] sm:$0xf]
    %v1817 = vld [vmem:[%s4 + $0x98] sm:$0xf]
    %v1818 = vld [vmem:[%s4 + $0x9c] sm:$0xf]
    %v1819 = vld [vmem:[%s4 + $0xa0] sm:$0xf]
    %v1820 = vld [vmem:[%s4 + $0xa4] sm:$0xf]
    %v1821 = vld [vmem:[%s4 + $0xa8] sm:$0xf]
    %v1822 = vld [vmem:[%s4 + $0xac] sm:$0xf]
    %v1823 = vld [vmem:[%s4 + $0xb0] sm:$0xf]
    %v1824 = vld [vmem:[%s4 + $0xb4] sm:$0xf]
    %v1825 = vld [vmem:[%s4 + $0xb8] sm:$0xf]
    %v1826 = vld [vmem:[%s4 + $0xbc] sm:$0xf]
    %v1827 = vld [vmem:[%s4 + $0xc0] sm:$0xf]
    %v1828 = vld [vmem:[%s4 + $0xc4] sm:$0xf]
    %v1829 = vld [vmem:[%s4 + $0xc8] sm:$0xf]
    %v1830 = vld [vmem:[%s4 + $0xcc] sm:$0xf]
    %v1831 = vld [vmem:[%s4 + $0xd0] sm:$0xf]
    %v1832 = vld [vmem:[%s4 + $0xd4] sm:$0xf]
    %v1833 = vld [vmem:[%s4 + $0xd8] sm:$0xf]
    %v1834 = vld [vmem:[%s4 + $0xdc] sm:$0xf]
    %v1835 = vld [vmem:[%s4 + $0xe0] sm:$0xf]
    %v1836 = vld [vmem:[%s4 + $0xe4] sm:$0xf]
    %v1837 = vld [vmem:[%s4 + $0xe8] sm:$0xf]
    %v1838 = vld [vmem:[%s4 + $0xec] sm:$0xf]
    %v1839 = vld [vmem:[%s4 + $0xf0] sm:$0xf]
    %v1840 = vld [vmem:[%s4 + $0xf4] sm:$0xf]
    %v1841 = vld [vmem:[%s4 + $0xf8] sm:$0xf]
    %v1842 = vld [vmem:[%s4 + $0xfc] sm:$0xf]
    %v1843 = vld [vmem:[%s5] sm:$0x1]
    %v1845 = vperm.slane %v1843, 0
    %v1911 = vunpack.c.l.b16 %v1779
    %v1912 = vunpack.c.l.b16 %v1780
    %v1913 = vunpack.c.l.b16 %v1781
    %v1914 = vunpack.c.l.b16 %v1782
    %v1915 = vunpack.c.l.b16 %v1783
    %v1916 = vunpack.c.l.b16 %v1784
    %v1917 = vunpack.c.l.b16 %v1785
    %v1918 = vunpack.c.l.b16 %v1786
    %v1919 = vunpack.c.l.b16 %v1787
    %v1920 = vunpack.c.l.b16 %v1788
    %v1921 = vunpack.c.l.b16 %v1789
    %v1922 = vunpack.c.l.b16 %v1790
    %v1923 = vunpack.c.l.b16 %v1791
    %v1924 = vunpack.c.l.b16 %v1792
    %v1925 = vunpack.c.l.b16 %v1793
    %v1926 = vunpack.c.l.b16 %v1794
    %v1927 = vunpack.c.l.b16 %v1795
    %v1928 = vunpack.c.l.b16 %v1796
    %v1929 = vunpack.c.l.b16 %v1797
    %v1930 = vunpack.c.l.b16 %v1798
    %v1931 = vunpack.c.l.b16 %v1799
    %v1932 = vunpack.c.l.b16 %v1800
    %v1933 = vunpack.c.l.b16 %v1801
    %v1934 = vunpack.c.l.b16 %v1802
    %v1935 = vunpack.c.l.b16 %v1803
    %v1936 = vunpack.c.l.b16 %v1804
    %v1937 = vunpack.c.l.b16 %v1805
    %v1938 = vunpack.c.l.b16 %v1806
    %v1939 = vunpack.c.l.b16 %v1807
    %v1940 = vunpack.c.l.b16 %v1808
    %v1941 = vunpack.c.l.b16 %v1809
    %v1942 = vunpack.c.l.b16 %v1810
    %v1943 = vunpack.c.l.b16 %v1811
    %v1944 = vunpack.c.l.b16 %v1812
    %v1945 = vunpack.c.l.b16 %v1813
    %v1946 = vunpack.c.l.b16 %v1814
    %v1947 = vunpack.c.l.b16 %v1815
    %v1948 = vunpack.c.l.b16 %v1816
    %v1949 = vunpack.c.l.b16 %v1817
    %v1950 = vunpack.c.l.b16 %v1818
    %v1951 = vunpack.c.l.b16 %v1819
    %v1952 = vunpack.c.l.b16 %v1820
    %v1953 = vunpack.c.l.b16 %v1821
    %v1954 = vunpack.c.l.b16 %v1822
    %v1955 = vunpack.c.l.b16 %v1823
    %v1956 = vunpack.c.l.b16 %v1824
    %v1957 = vunpack.c.l.b16 %v1825
    %v1958 = vunpack.c.l.b16 %v1826
    %v1959 = vunpack.c.l.b16 %v1827
    %v1960 = vunpack.c.l.b16 %v1828
    %v1961 = vunpack.c.l.b16 %v1829
    %v1962 = vunpack.c.l.b16 %v1830
    %v1963 = vunpack.c.l.b16 %v1831
    %v1964 = vunpack.c.l.b16 %v1832
    %v1965 = vunpack.c.l.b16 %v1833
    %v1966 = vunpack.c.l.b16 %v1834
    %v1967 = vunpack.c.l.b16 %v1835
    %v1968 = vunpack.c.l.b16 %v1836
    %v1969 = vunpack.c.l.b16 %v1837
    %v1970 = vunpack.c.l.b16 %v1838
    %v1971 = vunpack.c.l.b16 %v1839
    %v1972 = vunpack.c.l.b16 %v1840
    %v1973 = vunpack.c.l.b16 %v1841
    %v1974 = vunpack.c.l.b16 %v1842
    %v1975 = vpack.c.b16 %v1912, %v1911
    %v1976 = vpack.c.b16 %v1914, %v1913
    %v1977 = vpack.c.b16 %v1916, %v1915
    %v1978 = vpack.c.b16 %v1918, %v1917
    %v1979 = vpack.c.b16 %v1920, %v1919
    %v1980 = vpack.c.b16 %v1922, %v1921
    %v1981 = vpack.c.b16 %v1924, %v1923
    %v1982 = vpack.c.b16 %v1926, %v1925
    %v1983 = vpack.c.b16 %v1928, %v1927
    %v1984 = vpack.c.b16 %v1930, %v1929
    %v1985 = vpack.c.b16 %v1932, %v1931
    %v1986 = vpack.c.b16 %v1934, %v1933
    %v1987 = vpack.c.b16 %v1936, %v1935
    %v1988 = vpack.c.b16 %v1938, %v1937
    %v1989 = vpack.c.b16 %v1940, %v1939
    %v1990 = vpack.c.b16 %v1942, %v1941
    %v1991 = vpack.c.b16 %v1944, %v1943
    %v1992 = vpack.c.b16 %v1946, %v1945
    %v1993 = vpack.c.b16 %v1948, %v1947
    %v1994 = vpack.c.b16 %v1950, %v1949
    %v1995 = vpack.c.b16 %v1952, %v1951
    %v1996 = vpack.c.b16 %v1954, %v1953
    %v1997 = vpack.c.b16 %v1956, %v1955
    %v1998 = vpack.c.b16 %v1958, %v1957
    %v1999 = vpack.c.b16 %v1960, %v1959
    %v2000 = vpack.c.b16 %v1962, %v1961
    %v2001 = vpack.c.b16 %v1964, %v1963
    %v2002 = vpack.c.b16 %v1966, %v1965
    %v2003 = vpack.c.b16 %v1968, %v1967
    %v2004 = vpack.c.b16 %v1970, %v1969
    %v2005 = vpack.c.b16 %v1972, %v1971
    %v2006 = vpack.c.b16 %v1974, %v1973
    %2039 = vmatpush.bf16.msra.mxu0 %v1982
    %2040 = vmatpush.bf16.msra.mxu0 %v1981
    %2041 = vmatpush.bf16.msra.mxu0 %v1980
    %2042 = vmatpush.bf16.msra.mxu0 %v1979
    %2043 = vmatpush.bf16.msra.mxu0 %v1978
    %2044 = vmatpush.bf16.msra.mxu0 %v1977
    %2045 = vmatpush.bf16.msra.mxu0 %v1976
    %2046 = vmatpush.bf16.msra.mxu0 %v1975
    %2047 = vmatmul.bf16.gmra.mxu0 %v1775
    %v2048 = vpop.f32.mrf.mxu0
    %v2049 = vadd.f32 %v1845, %v2048
    %v2050 = vpop.f32.mrf.mxu0
    %2051 = vdwg.mxu0
    %2052 = vmatpush.bf16.msra.mxu0 %v1990
    %2053 = vmatpush.bf16.msra.mxu0 %v1989
    %2054 = vmatpush.bf16.msra.mxu0 %v1988
    %2055 = vmatpush.bf16.msra.mxu0 %v1987
    %2056 = vmatpush.bf16.msra.mxu0 %v1986
    %2057 = vmatpush.bf16.msra.mxu0 %v1985
    %2058 = vmatpush.bf16.msra.mxu0 %v1984
    %2059 = vmatpush.bf16.msra.mxu0 %v1983
    %2060 = vmatmul.bf16.gmra.mxu0 %v1776
    %v2061 = vpop.f32.mrf.mxu0
    %v2062 = vadd.f32 %v2049, %v2061
    %v2063 = vpop.f32.mrf.mxu0
    %2064 = vdwg.mxu0
    %2065 = vmatpush.bf16.msra.mxu0 %v1998
    %2066 = vmatpush.bf16.msra.mxu0 %v1997
    %2067 = vmatpush.bf16.msra.mxu0 %v1996
    %2068 = vmatpush.bf16.msra.mxu0 %v1995
    %2069 = vmatpush.bf16.msra.mxu0 %v1994
    %2070 = vmatpush.bf16.msra.mxu0 %v1993
    %2071 = vmatpush.bf16.msra.mxu0 %v1992
    %2072 = vmatpush.bf16.msra.mxu0 %v1991
    %2073 = vmatmul.bf16.gmra.mxu0 %v1777
    %v2074 = vpop.f32.mrf.mxu0
    %v2075 = vadd.f32 %v2062, %v2074
    %v2076 = vpop.f32.mrf.mxu0
    %2077 = vdwg.mxu0
    %2078 = vmatpush.bf16.msra.mxu0 %v2006
    %2079 = vmatpush.bf16.msra.mxu0 %v2005
    %2080 = vmatpush.bf16.msra.mxu0 %v2004
    %2081 = vmatpush.bf16.msra.mxu0 %v2003
    %2082 = vmatpush.bf16.msra.mxu0 %v2002
    %2083 = vmatpush.bf16.msra.mxu0 %v2001
    %2084 = vmatpush.bf16.msra.mxu0 %v2000
    %2085 = vmatpush.bf16.msra.mxu0 %v1999
    %2086 = vmatmul.bf16.gmra.mxu0 %v1778
    %v2087 = vpop.f32.mrf.mxu0
    %v2088 = vadd.f32 %v2075, %v2087
    %v2089 = vpop.f32.mrf.mxu0
    %2090 = vdwg.mxu0
    %2091 = vst.msk [vmem:[#allocation5] sm:$0xff] %vm1245, %v2088
    // Predicated region
    $region30: #{tpu_custom_call.1} parent=1 // pred_check
      _
    $region31: #{tpu_custom_call.1} parent=1 // pred_check_branch
      %2093 = sbr.rel (0) target = $region33
    $region32: #{tpu_custom_call.1} parent=1 // pred_region
      %2095 = vsyncadd [#allocation4], 0
      %s2097 = sshll.u32 [#allocation5], 4
      %s2098 = int_to_ptr.vmem [resolvable:$true] %s2097
      %s2099 = sshll.u32 %s6, 4
      %s2100 = int_to_ptr.hbm [resolvable:$true] %s2099
      %2102 = dma.vmem_to_hbm [thread:$0]  %s2098, 128, %s2100, [#allocation4]
    $region33: #{tpu_custom_call.1} parent=1 // pred_fallthru
      _
    // Predicated region
    $region34: #{tpu_custom_call.1} parent=1 // pred_check
      _
    $region35: #{tpu_custom_call.1} parent=1 // pred_check_branch
      %2104 = sbr.rel (0) target = $region37
    $region36: #{tpu_custom_call.1} parent=1 // pred_region
      %2106 = dma.done [#allocation4], 128
    $region37: #{tpu_custom_call.1} parent=1 // pred_fallthru
      _
    %2107 = vsyncpa [#allocation3], 1
    %2108 = vsyncpa [#allocation4], 1

</llo_original>
